<compile_context>
chip_gen: v7x
topology: tpu7x:2x2x1
jax: 0.10.0
libtpu: 0.0.40
codegen_flags: <defaults>
</compile_context>

<pallas_src>
import functools

import jax
import jax.numpy as jnp
from jax import lax
from jax.experimental import pallas as pl
from jax.experimental.pallas import tpu as pltpu


# ----------------------------------------------------------------------------
# Tiled linear kernel:  y = x @ W + b   (x: (M, K), W: (K, N), b: (N,))
# Grid (M/tm, N/tn, K/tk), f32 accumulator in VMEM, bias added at finalize.
# ----------------------------------------------------------------------------
def _linear_kernel(x_ref, w_ref, b_ref, o_ref, acc_ref):
    @pl.when(pl.program_id(2) == 0)
    def _():
        acc_ref[...] = jnp.zeros_like(acc_ref)

    acc_ref[...] += jnp.dot(x_ref[...], w_ref[...],
                            preferred_element_type=jnp.float32)

    @pl.when(pl.program_id(2) == pl.num_programs(2) - 1)
    def _():
        o_ref[...] = (acc_ref[...] + b_ref[...].astype(jnp.float32)
                      ).astype(o_ref.dtype)


def _pick_tile(dim, target, align):
    """Largest power-of-two tile <= target that divides dim (>= align), else dim."""
    if dim <= target:
        return dim
    t = target
    while t >= align:
        if dim % t == 0:
            return t
        t //= 2
    return dim


def pallas_linear(x2d, w, b, *, tm=256, tn=256, tk=512):
    """x2d: (M, K); w: (K, N); b: (N,) -> (M, N)."""
    M, K = x2d.shape
    Kw, N = w.shape
    assert K == Kw
    tm = _pick_tile(M, tm, 8)
    tn = _pick_tile(N, tn, 128)
    tk = _pick_tile(K, tk, 128)
    grid = (M // tm, N // tn, K // tk)
    return pl.pallas_call(
        _linear_kernel,
        out_shape=jax.ShapeDtypeStruct((M, N), x2d.dtype),
        grid=grid,
        in_specs=[
            pl.BlockSpec((tm, tk), lambda i, j, kk: (i, kk)),
            pl.BlockSpec((tk, tn), lambda i, j, kk: (kk, j)),
            pl.BlockSpec((1, tn), lambda i, j, kk: (0, j)),
        ],
        out_specs=pl.BlockSpec((tm, tn), lambda i, j, kk: (i, j)),
        scratch_shapes=[pltpu.VMEM((tm, tn), jnp.float32)],
        compiler_params=pltpu.CompilerParams(
            dimension_semantics=("parallel", "parallel", "arbitrary")),
    )(x2d, w, b.reshape(1, N))


# ----------------------------------------------------------------------------
# Attention kernels: one grid step = one batch element, all heads.
# Head split/merge happens in-kernel via static feature-dim slices, so the
# output is emitted directly in (B, S, D) layout (lane-dense stores).
# ----------------------------------------------------------------------------
def _sdpa_head(q, k, v, neg_mask, scale):
    """q: (Sq, depth), k/v: (Sk, depth), neg_mask: (Sq, Sk) -> f32 (Sq, depth)."""
    qf = q.astype(jnp.float32) * scale            # fold scale into q (cheap dim)
    scores = lax.dot_general(                     # contract last dims: no k.T
        qf, k.astype(jnp.float32),
        dimension_numbers=(((1,), (1,)), ((), ())),
        preferred_element_type=jnp.float32)
    scores = scores + neg_mask
    scores = scores - jnp.max(scores, axis=-1, keepdims=True)
    probs = jnp.exp(scores)
    probs = probs * pl.reciprocal(jnp.sum(probs, axis=-1, keepdims=True),
                                  approx=True)    # EUP vrcp, frees VALU
    return jnp.dot(probs.astype(v.dtype), v, preferred_element_type=jnp.float32)


def _attention_kernel_fused(qkv_ref, m_ref, o_ref, *, num_heads, depth, d_model):
    """qkv_ref: (1, S, 3D) packed [Q|K|V] projections; o_ref: (1, S, D)."""
    neg_mask = m_ref[0] * (-1000000000.0)         # (S, S), hoisted out of head loop
    scale = 1.0 / float(depth) ** 0.5
    for h in range(num_heads):
        off = h * depth
        out = _sdpa_head(qkv_ref[0, :, pl.ds(off, depth)],
                         qkv_ref[0, :, pl.ds(d_model + off, depth)],
                         qkv_ref[0, :, pl.ds(2 * d_model + off, depth)],
                         neg_mask, scale)
        o_ref[0, :, pl.ds(off, depth)] = out.astype(o_ref.dtype)


def _attention_kernel(q_ref, k_ref, v_ref, m_ref, o_ref, *, num_heads, depth):
    """q_ref: (1, Sq, D); k_ref/v_ref: (1, Sk, D); o_ref: (1, Sq, D)."""
    neg_mask = m_ref[0] * (-1000000000.0)
    scale = 1.0 / float(depth) ** 0.5
    for h in range(num_heads):
        off = h * depth
        out = _sdpa_head(q_ref[0, :, pl.ds(off, depth)],
                         k_ref[0, :, pl.ds(off, depth)],
                         v_ref[0, :, pl.ds(off, depth)],
                         neg_mask, scale)
        o_ref[0, :, pl.ds(off, depth)] = out.astype(o_ref.dtype)


def _prep_mask(mask, B, Sq, Sk):
    """Return ((1|B), Sq, Sk) mask (no batch broadcast in HBM) + its index_map."""
    if mask is None:
        m3 = jnp.zeros((1, Sq, Sk), jnp.float32)
    else:
        m = jnp.asarray(mask, jnp.float32)
        if m.ndim < 2:
            raise ValueError("mask must have at least 2 dims (..., Sq, Sk)")
        lead = 1
        for d in m.shape[:-2]:
            lead *= d
        if lead not in (1, B):
            raise ValueError("mask leading dims must collapse to 1 or batch size")
        m = m.reshape((lead,) + m.shape[-2:])
        m3 = jnp.broadcast_to(m, (lead, Sq, Sk))
    if m3.shape[0] == B and B != 1:
        idx = lambda bi: (bi, 0, 0)
    else:
        idx = lambda bi: (0, 0, 0)
    return m3, idx


def pallas_attention_fused(qkv, mask, num_heads):
    """qkv: (B, S, 3D) packed projections -> context (B, S, D)."""
    B, S, D3 = qkv.shape
    D = D3 // 3
    depth = D // num_heads
    mask3, mask_idx = _prep_mask(mask, B, S, S)
    kern = functools.partial(_attention_kernel_fused,
                             num_heads=num_heads, depth=depth, d_model=D)
    return pl.pallas_call(
        kern,
        out_shape=jax.ShapeDtypeStruct((B, S, D), qkv.dtype),
        grid=(B,),
        in_specs=[pl.BlockSpec((1, S, D3), lambda bi: (bi, 0, 0)),
                  pl.BlockSpec((1, S, S), mask_idx)],
        out_specs=pl.BlockSpec((1, S, D), lambda bi: (bi, 0, 0)),
        compiler_params=pltpu.CompilerParams(dimension_semantics=("parallel",)),
    )(qkv, mask3)


def pallas_attention(qp, kp, vp, mask, num_heads):
    """qp: (B, Sq, D); kp/vp: (B, Sk, D) -> context (B, Sq, D)."""
    B, Sq, D = qp.shape
    Sk = kp.shape[1]
    depth = D // num_heads
    mask3, mask_idx = _prep_mask(mask, B, Sq, Sk)
    kern = functools.partial(_attention_kernel, num_heads=num_heads, depth=depth)
    q_spec = pl.BlockSpec((1, Sq, D), lambda bi: (bi, 0, 0))
    kv_spec = pl.BlockSpec((1, Sk, D), lambda bi: (bi, 0, 0))
    return pl.pallas_call(
        kern,
        out_shape=jax.ShapeDtypeStruct((B, Sq, D), qp.dtype),
        grid=(B,),
        in_specs=[q_spec, kv_spec, kv_spec,
                  pl.BlockSpec((1, Sq, Sk), mask_idx)],
        out_specs=q_spec,
        compiler_params=pltpu.CompilerParams(dimension_semantics=("parallel",)),
    )(qp, kp, vp, mask3)


# ----------------------------------------------------------------------------
# Module wrapper
# ----------------------------------------------------------------------------
def init_mha_params(key, d_model):
    """Mirrors nn.Linear(d_model, d_model) x 4; Q/K/V weights stored fused."""
    ks = jax.random.split(key, 8)
    bound = 1.0 / float(d_model) ** 0.5

    def lin(kw, kb):
        w = jax.random.uniform(kw, (d_model, d_model), jnp.float32, -bound, bound)
        b = jax.random.uniform(kb, (d_model,), jnp.float32, -bound, bound)
        return w, b

    wq, bq = lin(ks[0], ks[1])
    wk, bk = lin(ks[2], ks[3])
    wv, bv = lin(ks[4], ks[5])
    wo, bo = lin(ks[6], ks[7])
    return dict(
        w_qkv=jnp.concatenate([wq, wk, wv], axis=1),   # (D, 3D)
        b_qkv=jnp.concatenate([bq, bk, bv], axis=0),   # (3D,)
        wo=wo, bo=bo)


@functools.partial(jax.jit, static_argnames=("num_heads",))
def _mha_forward_self(params, x, mask, *, num_heads):
    """Self-attention path: fused QKV projection, packed qkv fed to attention."""
    B, S, D = x.shape
    qkv = pallas_linear(x.reshape(B * S, D), params["w_qkv"], params["b_qkv"])
    ctx = pallas_attention_fused(qkv.reshape(B, S, 3 * D), mask, num_heads)
    out = pallas_linear(ctx.reshape(B * S, D), params["wo"], params["bo"])
    return out.reshape(B, S, D)


@functools.partial(jax.jit, static_argnames=("num_heads",))
def _mha_forward_general(params, q, k, v, mask, *, num_heads):
    """General path (distinct q/k/v): three tiled projections, shared kernels."""
    B, Sq, D = q.shape
    Sk = k.shape[1]
    wq, bq = params["w_qkv"][:, :D], params["b_qkv"][:D]
    wk, bk = params["w_qkv"][:, D:2 * D], params["b_qkv"][D:2 * D]
    wv, bv = params["w_qkv"][:, 2 * D:], params["b_qkv"][2 * D:]
    qp = pallas_linear(q.reshape(B * Sq, D), wq, bq).reshape(B, Sq, D)
    kp = pallas_linear(k.reshape(B * Sk, D), wk, bk).reshape(B, Sk, D)
    vp = pallas_linear(v.reshape(B * Sk, D), wv, bv).reshape(B, Sk, D)
    ctx = pallas_attention(qp, kp, vp, mask, num_heads)
    out = pallas_linear(ctx.reshape(B * Sq, D), params["wo"], params["bo"])
    return out.reshape(B, Sq, D)


def mha_forward(params, q, k, v, mask, num_heads):
    """Matches MultiHeadAttention.forward(q, k, v, mask)."""
    if q is k and k is v:
        return _mha_forward_self(params, q, mask, num_heads=num_heads)
    return _mha_forward_general(params, q, k, v, mask, num_heads=num_heads)


# ----------------------------------------------------------------------------
# Pure-JAX reference for self-check
# ----------------------------------------------------------------------------
def mha_reference(params, q, k, v, mask, num_heads):
    B, Sq, D = q.shape
    depth = D // num_heads
    wq, wk, wv = (params["w_qkv"][:, i * D:(i + 1) * D] for i in range(3))
    bq, bk, bv = (params["b_qkv"][i * D:(i + 1) * D] for i in range(3))

    def split(x):
        Bx, Sx, _ = x.shape
        return x.reshape(Bx, Sx, num_heads, depth).transpose(0, 2, 1, 3)

    qh = split(q @ wq + bq)
    kh = split(k @ wk + bk)
    vh = split(v @ wv + bv)
    scores = jnp.einsum("bhqd,bhkd->bhqk", qh, kh) / jnp.sqrt(jnp.float32(depth))
    if mask is not None:
        scores = scores + mask * (-1000000000.0)
    probs = jax.nn.softmax(scores, axis=-1)
    ctx = jnp.einsum("bhqk,bhkd->bhqd", probs, vh)
    ctx = ctx.transpose(0, 2, 1, 3).reshape(B, Sq, D)
    return ctx @ params["wo"] + params["bo"]


if __name__ == "__main__":
    B, S, D, H = 2, 8, 32, 4

    key = jax.random.PRNGKey(0)
    kpar, kx, kq, kk, kv = jax.random.split(key, 5)
    params = init_mha_params(kpar, D)

    # Tolerance is relaxed because the kernel uses the approximate EUP
    # reciprocal for the softmax denominator (relative error ~1e-3).
    ATOL = RTOL = 1e-2

    # 1) Self-attention (fused QKV path) with a look-ahead mask (1,1,S,S).
    x = jax.random.normal(kx, (B, S, D), jnp.float32)
    mask = jnp.triu(jnp.ones((S, S), jnp.float32), k=1)[None, None, :, :]
    out_self = jax.block_until_ready(mha_forward(params, x, x, x, mask, H))
    ref_self = mha_reference(params, x, x, x, mask, H)
    assert out_self.shape == (B, S, D)
    assert jnp.allclose(out_self, ref_self, atol=ATOL, rtol=RTOL), \
        "self-attention mismatch vs reference"

    # 2) General path (distinct q/k/v, no mask).
    q = jax.random.normal(kq, (B, S, D), jnp.float32)
    k = jax.random.normal(kk, (B, S, D), jnp.float32)
    v = jax.random.normal(kv, (B, S, D), jnp.float32)
    out_gen = jax.block_until_ready(mha_forward(params, q, k, v, None, H))
    ref_gen = mha_reference(params, q, k, v, None, H)
    assert jnp.allclose(out_gen, ref_gen, atol=ATOL, rtol=RTOL), \
        "general-attention mismatch vs reference"

    print("KERNEL_OK")
</pallas_src>

<mosaic_0001>
module attributes {stable_mosaic.version = 11 : i64} {
  func.func @_linear_kernel(%arg0: i32, %arg1: i32, %arg2: i32, %arg3: memref<16x32xf32, #tpu.memory_space<vmem>>, %arg4: memref<32x96xf32, #tpu.memory_space<vmem>>, %arg5: memref<1x96xf32, #tpu.memory_space<vmem>>, %arg6: memref<16x96xf32, #tpu.memory_space<vmem>>, %arg7: memref<16x96xf32, #tpu.memory_space<vmem>>) attributes {dimension_semantics = [#tpu.dimension_semantics<parallel>, #tpu.dimension_semantics<parallel>, #tpu.dimension_semantics<arbitrary>], iteration_bounds = array<i64: 1, 1, 1>, scalar_prefetch = 0 : i64, scratch_operands = 1 : i64, tpu.core_type = #tpu.core_type<tc>, window_params = [{transform_indices = @transform_0, window_bounds = array<i64: 16, 32>}, {transform_indices = @transform_1, window_bounds = array<i64: 32, 96>}, {transform_indices = @transform_2, window_bounds = array<i64: 1, 96>}, {transform_indices = @transform_3, window_bounds = array<i64: 16, 96>}]} {
    %c0_i32 = arith.constant 0 : i32
    %0 = arith.cmpi eq, %arg2, %c0_i32 : i32
    %1 = arith.extui %0 : i1 to i32
    %c0_i32_0 = arith.constant 0 : i32
    %2 = arith.cmpi ne, %1, %c0_i32_0 : i32
    scf.if %2 {
      %cst_10 = arith.constant 0.000000e+00 : f32
      %12 = vector.broadcast %cst_10 : f32 to vector<16x96xf32>
      %c0_11 = arith.constant 0 : index
      %c0_12 = arith.constant 0 : index
      %13 = vector.load %arg7[%c0_11, %c0_12] : memref<16x96xf32, #tpu.memory_space<vmem>>, vector<16x96xf32>
      tpu.vector_store %arg7[%c0_11, %c0_12], %12 {strides = array<i32>} : memref<16x96xf32, #tpu.memory_space<vmem>>, vector<16x96xf32>,
    } else {
    }
    %c0 = arith.constant 0 : index
    %c0_1 = arith.constant 0 : index
    %3 = vector.load %arg7[%c0, %c0_1] : memref<16x96xf32, #tpu.memory_space<vmem>>, vector<16x96xf32>
    %c0_2 = arith.constant 0 : index
    %c0_3 = arith.constant 0 : index
    %4 = vector.load %arg3[%c0_2, %c0_3] : memref<16x32xf32, #tpu.memory_space<vmem>>, vector<16x32xf32>
    %c0_4 = arith.constant 0 : index
    %c0_5 = arith.constant 0 : index
    %5 = vector.load %arg4[%c0_4, %c0_5] : memref<32x96xf32, #tpu.memory_space<vmem>>, vector<32x96xf32>
    %cst = arith.constant dense<0.000000e+00> : vector<16x96xf32>
    %6 = tpu.matmul %4, %5, %cst {dimension_numbers = #tpu.dot_dimension_numbers<[1], [0], [0], [1], [0, 0, 1, 1], [], []>} : vector<16x32xf32>, vector<32x96xf32>, vector<16x96xf32> -> vector<16x96xf32>
    %7 = arith.addf %3, %6 : vector<16x96xf32>
    %c0_6 = arith.constant 0 : index
    %c0_7 = arith.constant 0 : index
    %8 = vector.load %arg7[%c0_6, %c0_7] : memref<16x96xf32, #tpu.memory_space<vmem>>, vector<16x96xf32>
    tpu.vector_store %arg7[%c0_6, %c0_7], %7 {strides = array<i32>} : memref<16x96xf32, #tpu.memory_space<vmem>>, vector<16x96xf32>,
    %c0_i32_8 = arith.constant 0 : i32
    %9 = arith.cmpi eq, %arg2, %c0_i32_8 : i32
    %10 = arith.extui %9 : i1 to i32
    %c0_i32_9 = arith.constant 0 : i32
    %11 = arith.cmpi ne, %10, %c0_i32_9 : i32
    scf.if %11 {
      %c0_10 = arith.constant 0 : index
      %c0_11 = arith.constant 0 : index
      %12 = vector.load %arg7[%c0_10, %c0_11] : memref<16x96xf32, #tpu.memory_space<vmem>>, vector<16x96xf32>
      %c0_12 = arith.constant 0 : index
      %c0_13 = arith.constant 0 : index
      %13 = vector.load %arg5[%c0_12, %c0_13] : memref<1x96xf32, #tpu.memory_space<vmem>>, vector<1x96xf32>
      %14 = vector.broadcast %13 : vector<1x96xf32> to vector<16x96xf32>
      %15 = arith.addf %12, %14 : vector<16x96xf32>
      %c0_14 = arith.constant 0 : index
      %c0_15 = arith.constant 0 : index
      %16 = vector.load %arg6[%c0_14, %c0_15] : memref<16x96xf32, #tpu.memory_space<vmem>>, vector<16x96xf32>
      tpu.vector_store %arg6[%c0_14, %c0_15], %15 {strides = array<i32>} : memref<16x96xf32, #tpu.memory_space<vmem>>, vector<16x96xf32>,
    } else {
    }
    return
  }
  func.func @transform_0(%arg0: i32, %arg1: i32, %arg2: i32) -> (i32, i32) {
    %c0_i32 = arith.constant 0 : i32
    return %arg0, %arg2 : i32, i32
  }
  func.func @transform_1(%arg0: i32, %arg1: i32, %arg2: i32) -> (i32, i32) {
    %c0_i32 = arith.constant 0 : i32
    return %arg2, %arg1 : i32, i32
  }
  func.func @transform_2(%arg0: i32, %arg1: i32, %arg2: i32) -> (i32, i32) {
    %c0_i32 = arith.constant 0 : i32
    %c0_i32_0 = arith.constant 0 : i32
    return %c0_i32, %arg1 : i32, i32
  }
  func.func @transform_3(%arg0: i32, %arg1: i32, %arg2: i32) -> (i32, i32) {
    %c0_i32 = arith.constant 0 : i32
    return %arg0, %arg1 : i32, i32
  }
}

module attributes {stable_mosaic.version = 11 : i64} {
  func.func @_attention_kernel_fused(%arg0: i32, %arg1: memref<1x8x96xf32, #tpu.memory_space<vmem>>, %arg2: memref<1x8x8xf32, #tpu.memory_space<vmem>>, %arg3: memref<1x8x32xf32, #tpu.memory_space<vmem>>) attributes {dimension_semantics = [#tpu.dimension_semantics<parallel>], iteration_bounds = array<i64: 2>, scalar_prefetch = 0 : i64, scratch_operands = 0 : i64, tpu.core_type = #tpu.core_type<tc>, window_params = [{transform_indices = @transform_0, window_bounds = array<i64: 1, 8, 96>}, {pipeline_mode = #tpu.pipeline_mode<synchronous>, transform_indices = @transform_1, window_bounds = array<i64: 1, 8, 8>}, {transform_indices = @transform_2, window_bounds = array<i64: 1, 8, 32>}]} {
    %c0 = arith.constant 0 : index
    %c0_0 = arith.constant 0 : index
    %c0_1 = arith.constant 0 : index
    %0 = vector.load %arg2[%c0, %c0_0, %c0_1] : memref<1x8x8xf32, #tpu.memory_space<vmem>>, vector<1x8x8xf32>
    %1 = vector.shape_cast %0 : vector<1x8x8xf32> to vector<8x8xf32>
    %cst = arith.constant -1.000000e+09 : f32
    %2 = vector.broadcast %cst : f32 to vector<8x8xf32>
    %3 = arith.mulf %1, %2 : vector<8x8xf32>
    %c0_2 = arith.constant 0 : index
    %c0_3 = arith.constant 0 : index
    %c0_4 = arith.constant 0 : index
    %4 = vector.load %arg1[%c0_2, %c0_3, %c0_4] : memref<1x8x96xf32, #tpu.memory_space<vmem>>, vector<1x8x8xf32>
    %5 = vector.shape_cast %4 : vector<1x8x8xf32> to vector<8x8xf32>
    %c0_5 = arith.constant 0 : index
    %c0_6 = arith.constant 0 : index
    %c32 = arith.constant 32 : index
    %6 = vector.load %arg1[%c0_5, %c0_6, %c32] : memref<1x8x96xf32, #tpu.memory_space<vmem>>, vector<1x8x8xf32>
    %7 = vector.shape_cast %6 : vector<1x8x8xf32> to vector<8x8xf32>
    %c0_7 = arith.constant 0 : index
    %c0_8 = arith.constant 0 : index
    %c64 = arith.constant 64 : index
    %8 = vector.load %arg1[%c0_7, %c0_8, %c64] : memref<1x8x96xf32, #tpu.memory_space<vmem>>, vector<1x8x8xf32>
    %9 = vector.shape_cast %8 : vector<1x8x8xf32> to vector<8x8xf32>
    %cst_9 = arith.constant 0.353553385 : f32
    %10 = vector.broadcast %cst_9 : f32 to vector<8x8xf32>
    %11 = arith.mulf %5, %10 : vector<8x8xf32>
    %cst_10 = arith.constant dense<0.000000e+00> : vector<8x8xf32>
    %12 = tpu.matmul %11, %7, %cst_10 {dimension_numbers = #tpu.dot_dimension_numbers<[1], [1], [0], [0], [0, 0, 1, 0], [], []>} : vector<8x8xf32>, vector<8x8xf32>, vector<8x8xf32> -> vector<8x8xf32>
    %13 = arith.addf %12, %3 : vector<8x8xf32>
    %cst_11 = arith.constant dense<0xFF800000> : vector<8xf32>
    %14 = vector.multi_reduction <maximumf>, %13, %cst_11 [1] : vector<8x8xf32> to vector<8xf32>
    %15 = vector.shape_cast %14 : vector<8xf32> to vector<8x1xf32>
    %16 = vector.broadcast %15 : vector<8x1xf32> to vector<8x8xf32>
    %17 = arith.subf %13, %16 : vector<8x8xf32>
    %18 = math.exp %17 : vector<8x8xf32>
    %cst_12 = arith.constant dense<0.000000e+00> : vector<8xf32>
    %19 = vector.multi_reduction <add>, %18, %cst_12 [1] : vector<8x8xf32> to vector<8xf32>
    %20 = vector.shape_cast %19 : vector<8xf32> to vector<8x1xf32>
    %21 = tpu.reciprocal %20 {approx = true} : vector<8x1xf32> -> vector<8x1xf32>
    %22 = vector.broadcast %21 : vector<8x1xf32> to vector<8x8xf32>
    %23 = arith.mulf %18, %22 : vector<8x8xf32>
    %cst_13 = arith.constant dense<0.000000e+00> : vector<8x8xf32>
    %24 = tpu.matmul %23, %9, %cst_13 {dimension_numbers = #tpu.dot_dimension_numbers<[1], [0], [0], [1], [0, 0, 1, 1], [], []>} : vector<8x8xf32>, vector<8x8xf32>, vector<8x8xf32> -> vector<8x8xf32>
    %c0_14 = arith.constant 0 : index
    %c0_15 = arith.constant 0 : index
    %c0_16 = arith.constant 0 : index
    %25 = vector.load %arg3[%c0_14, %c0_15, %c0_16] : memref<1x8x32xf32, #tpu.memory_space<vmem>>, vector<1x8x8xf32>
    %26 = vector.shape_cast %25 : vector<1x8x8xf32> to vector<8x8xf32>
    %27 = vector.shape_cast %24 : vector<8x8xf32> to vector<1x8x8xf32>
    tpu.vector_store %arg3[%c0_14, %c0_15, %c0_16], %27 {strides = array<i32>} : memref<1x8x32xf32, #tpu.memory_space<vmem>>, vector<1x8x8xf32>,
    %c0_17 = arith.constant 0 : index
    %c0_18 = arith.constant 0 : index
    %c8 = arith.constant 8 : index
    %28 = vector.load %arg1[%c0_17, %c0_18, %c8] : memref<1x8x96xf32, #tpu.memory_space<vmem>>, vector<1x8x8xf32>
    %29 = vector.shape_cast %28 : vector<1x8x8xf32> to vector<8x8xf32>
    %c0_19 = arith.constant 0 : index
    %c0_20 = arith.constant 0 : index
    %c40 = arith.constant 40 : index
    %30 = vector.load %arg1[%c0_19, %c0_20, %c40] : memref<1x8x96xf32, #tpu.memory_space<vmem>>, vector<1x8x8xf32>
    %31 = vector.shape_cast %30 : vector<1x8x8xf32> to vector<8x8xf32>
    %c0_21 = arith.constant 0 : index
    %c0_22 = arith.constant 0 : index
    %c72 = arith.constant 72 : index
    %32 = vector.load %arg1[%c0_21, %c0_22, %c72] : memref<1x8x96xf32, #tpu.memory_space<vmem>>, vector<1x8x8xf32>
    %33 = vector.shape_cast %32 : vector<1x8x8xf32> to vector<8x8xf32>
    %cst_23 = arith.constant 0.353553385 : f32
    %34 = vector.broadcast %cst_23 : f32 to vector<8x8xf32>
    %35 = arith.mulf %29, %34 : vector<8x8xf32>
    %cst_24 = arith.constant dense<0.000000e+00> : vector<8x8xf32>
    %36 = tpu.matmul %35, %31, %cst_24 {dimension_numbers = #tpu.dot_dimension_numbers<[1], [1], [0], [0], [0, 0, 1, 0], [], []>} : vector<8x8xf32>, vector<8x8xf32>, vector<8x8xf32> -> vector<8x8xf32>
    %37 = arith.addf %36, %3 : vector<8x8xf32>
    %cst_25 = arith.constant dense<0xFF800000> : vector<8xf32>
    %38 = vector.multi_reduction <maximumf>, %37, %cst_25 [1] : vector<8x8xf32> to vector<8xf32>
    %39 = vector.shape_cast %38 : vector<8xf32> to vector<8x1xf32>
    %40 = vector.broadcast %39 : vector<8x1xf32> to vector<8x8xf32>
    %41 = arith.subf %37, %40 : vector<8x8xf32>
    %42 = math.exp %41 : vector<8x8xf32>
    %cst_26 = arith.constant dense<0.000000e+00> : vector<8xf32>
    %43 = vector.multi_reduction <add>, %42, %cst_26 [1] : vector<8x8xf32> to vector<8xf32>
    %44 = vector.shape_cast %43 : vector<8xf32> to vector<8x1xf32>
    %45 = tpu.reciprocal %44 {approx = true} : vector<8x1xf32> -> vector<8x1xf32>
    %46 = vector.broadcast %45 : vector<8x1xf32> to vector<8x8xf32>
    %47 = arith.mulf %42, %46 : vector<8x8xf32>
    %cst_27 = arith.constant dense<0.000000e+00> : vector<8x8xf32>
    %48 = tpu.matmul %47, %33, %cst_27 {dimension_numbers = #tpu.dot_dimension_numbers<[1], [0], [0], [1], [0, 0, 1, 1], [], []>} : vector<8x8xf32>, vector<8x8xf32>, vector<8x8xf32> -> vector<8x8xf32>
    %c0_28 = arith.constant 0 : index
    %c0_29 = arith.constant 0 : index
    %c8_30 = arith.constant 8 : index
    %49 = vector.load %arg3[%c0_28, %c0_29, %c8_30] : memref<1x8x32xf32, #tpu.memory_space<vmem>>, vector<1x8x8xf32>
    %50 = vector.shape_cast %49 : vector<1x8x8xf32> to vector<8x8xf32>
    %51 = vector.shape_cast %48 : vector<8x8xf32> to vector<1x8x8xf32>
    tpu.vector_store %arg3[%c0_28, %c0_29, %c8_30], %51 {strides = array<i32>} : memref<1x8x32xf32, #tpu.memory_space<vmem>>, vector<1x8x8xf32>,
    %c0_31 = arith.constant 0 : index
    %c0_32 = arith.constant 0 : index
    %c16 = arith.constant 16 : index
    %52 = vector.load %arg1[%c0_31, %c0_32, %c16] : memref<1x8x96xf32, #tpu.memory_space<vmem>>, vector<1x8x8xf32>
    %53 = vector.shape_cast %52 : vector<1x8x8xf32> to vector<8x8xf32>
    %c0_33 = arith.constant 0 : index
    %c0_34 = arith.constant 0 : index
    %c48 = arith.constant 48 : index
    %54 = vector.load %arg1[%c0_33, %c0_34, %c48] : memref<1x8x96xf32, #tpu.memory_space<vmem>>, vector<1x8x8xf32>
    %55 = vector.shape_cast %54 : vector<1x8x8xf32> to vector<8x8xf32>
    %c0_35 = arith.constant 0 : index
    %c0_36 = arith.constant 0 : index
    %c80 = arith.constant 80 : index
    %56 = vector.load %arg1[%c0_35, %c0_36, %c80] : memref<1x8x96xf32, #tpu.memory_space<vmem>>, vector<1x8x8xf32>
    %57 = vector.shape_cast %56 : vector<1x8x8xf32> to vector<8x8xf32>
    %cst_37 = arith.constant 0.353553385 : f32
    %58 = vector.broadcast %cst_37 : f32 to vector<8x8xf32>
    %59 = arith.mulf %53, %58 : vector<8x8xf32>
    %cst_38 = arith.constant dense<0.000000e+00> : vector<8x8xf32>
    %60 = tpu.matmul %59, %55, %cst_38 {dimension_numbers = #tpu.dot_dimension_numbers<[1], [1], [0], [0], [0, 0, 1, 0], [], []>} : vector<8x8xf32>, vector<8x8xf32>, vector<8x8xf32> -> vector<8x8xf32>
    %61 = arith.addf %60, %3 : vector<8x8xf32>
    %cst_39 = arith.constant dense<0xFF800000> : vector<8xf32>
    %62 = vector.multi_reduction <maximumf>, %61, %cst_39 [1] : vector<8x8xf32> to vector<8xf32>
    %63 = vector.shape_cast %62 : vector<8xf32> to vector<8x1xf32>
    %64 = vector.broadcast %63 : vector<8x1xf32> to vector<8x8xf32>
    %65 = arith.subf %61, %64 : vector<8x8xf32>
    %66 = math.exp %65 : vector<8x8xf32>
    %cst_40 = arith.constant dense<0.000000e+00> : vector<8xf32>
    %67 = vector.multi_reduction <add>, %66, %cst_40 [1] : vector<8x8xf32> to vector<8xf32>
    %68 = vector.shape_cast %67 : vector<8xf32> to vector<8x1xf32>
    %69 = tpu.reciprocal %68 {approx = true} : vector<8x1xf32> -> vector<8x1xf32>
    %70 = vector.broadcast %69 : vector<8x1xf32> to vector<8x8xf32>
    %71 = arith.mulf %66, %70 : vector<8x8xf32>
    %cst_41 = arith.constant dense<0.000000e+00> : vector<8x8xf32>
    %72 = tpu.matmul %71, %57, %cst_41 {dimension_numbers = #tpu.dot_dimension_numbers<[1], [0], [0], [1], [0, 0, 1, 1], [], []>} : vector<8x8xf32>, vector<8x8xf32>, vector<8x8xf32> -> vector<8x8xf32>
    %c0_42 = arith.constant 0 : index
    %c0_43 = arith.constant 0 : index
    %c16_44 = arith.constant 16 : index
    %73 = vector.load %arg3[%c0_42, %c0_43, %c16_44] : memref<1x8x32xf32, #tpu.memory_space<vmem>>, vector<1x8x8xf32>
    %74 = vector.shape_cast %73 : vector<1x8x8xf32> to vector<8x8xf32>
    %75 = vector.shape_cast %72 : vector<8x8xf32> to vector<1x8x8xf32>
    tpu.vector_store %arg3[%c0_42, %c0_43, %c16_44], %75 {strides = array<i32>} : memref<1x8x32xf32, #tpu.memory_space<vmem>>, vector<1x8x8xf32>,
    %c0_45 = arith.constant 0 : index
    %c0_46 = arith.constant 0 : index
    %c24 = arith.constant 24 : index
    %76 = vector.load %arg1[%c0_45, %c0_46, %c24] : memref<1x8x96xf32, #tpu.memory_space<vmem>>, vector<1x8x8xf32>
    %77 = vector.shape_cast %76 : vector<1x8x8xf32> to vector<8x8xf32>
    %c0_47 = arith.constant 0 : index
    %c0_48 = arith.constant 0 : index
    %c56 = arith.constant 56 : index
    %78 = vector.load %arg1[%c0_47, %c0_48, %c56] : memref<1x8x96xf32, #tpu.memory_space<vmem>>, vector<1x8x8xf32>
    %79 = vector.shape_cast %78 : vector<1x8x8xf32> to vector<8x8xf32>
    %c0_49 = arith.constant 0 : index
    %c0_50 = arith.constant 0 : index
    %c88 = arith.constant 88 : index
    %80 = vector.load %arg1[%c0_49, %c0_50, %c88] : memref<1x8x96xf32, #tpu.memory_space<vmem>>, vector<1x8x8xf32>
    %81 = vector.shape_cast %80 : vector<1x8x8xf32> to vector<8x8xf32>
    %cst_51 = arith.constant 0.353553385 : f32
    %82 = vector.broadcast %cst_51 : f32 to vector<8x8xf32>
    %83 = arith.mulf %77, %82 : vector<8x8xf32>
    %cst_52 = arith.constant dense<0.000000e+00> : vector<8x8xf32>
    %84 = tpu.matmul %83, %79, %cst_52 {dimension_numbers = #tpu.dot_dimension_numbers<[1], [1], [0], [0], [0, 0, 1, 0], [], []>} : vector<8x8xf32>, vector<8x8xf32>, vector<8x8xf32> -> vector<8x8xf32>
    %85 = arith.addf %84, %3 : vector<8x8xf32>
    %cst_53 = arith.constant dense<0xFF800000> : vector<8xf32>
    %86 = vector.multi_reduction <maximumf>, %85, %cst_53 [1] : vector<8x8xf32> to vector<8xf32>
    %87 = vector.shape_cast %86 : vector<8xf32> to vector<8x1xf32>
    %88 = vector.broadcast %87 : vector<8x1xf32> to vector<8x8xf32>
    %89 = arith.subf %85, %88 : vector<8x8xf32>
    %90 = math.exp %89 : vector<8x8xf32>
    %cst_54 = arith.constant dense<0.000000e+00> : vector<8xf32>
    %91 = vector.multi_reduction <add>, %90, %cst_54 [1] : vector<8x8xf32> to vector<8xf32>
    %92 = vector.shape_cast %91 : vector<8xf32> to vector<8x1xf32>
    %93 = tpu.reciprocal %92 {approx = true} : vector<8x1xf32> -> vector<8x1xf32>
    %94 = vector.broadcast %93 : vector<8x1xf32> to vector<8x8xf32>
    %95 = arith.mulf %90, %94 : vector<8x8xf32>
    %cst_55 = arith.constant dense<0.000000e+00> : vector<8x8xf32>
    %96 = tpu.matmul %95, %81, %cst_55 {dimension_numbers = #tpu.dot_dimension_numbers<[1], [0], [0], [1], [0, 0, 1, 1], [], []>} : vector<8x8xf32>, vector<8x8xf32>, vector<8x8xf32> -> vector<8x8xf32>
    %c0_56 = arith.constant 0 : index
    %c0_57 = arith.constant 0 : index
    %c24_58 = arith.constant 24 : index
    %97 = vector.load %arg3[%c0_56, %c0_57, %c24_58] : memref<1x8x32xf32, #tpu.memory_space<vmem>>, vector<1x8x8xf32>
    %98 = vector.shape_cast %97 : vector<1x8x8xf32> to vector<8x8xf32>
    %99 = vector.shape_cast %96 : vector<8x8xf32> to vector<1x8x8xf32>
    tpu.vector_store %arg3[%c0_56, %c0_57, %c24_58], %99 {strides = array<i32>} : memref<1x8x32xf32, #tpu.memory_space<vmem>>, vector<1x8x8xf32>,
    return
  }
  func.func @transform_0(%arg0: i32) -> (i32, i32, i32) {
    %c0_i32 = arith.constant 0 : i32
    %c0_i32_0 = arith.constant 0 : i32
    %c0_i32_1 = arith.constant 0 : i32
    return %arg0, %c0_i32, %c0_i32_0 : i32, i32, i32
  }
  func.func @transform_1(%arg0: i32) -> (i32, i32, i32) {
    %c0_i32 = arith.constant 0 : i32
    %c0_i32_0 = arith.constant 0 : i32
    %c0_i32_1 = arith.constant 0 : i32
    %c0_i32_2 = arith.constant 0 : i32
    return %c0_i32, %c0_i32_0, %c0_i32_1 : i32, i32, i32
  }
  func.func @transform_2(%arg0: i32) -> (i32, i32, i32) {
    %c0_i32 = arith.constant 0 : i32
    %c0_i32_0 = arith.constant 0 : i32
    %c0_i32_1 = arith.constant 0 : i32
    return %arg0, %c0_i32, %c0_i32_0 : i32, i32, i32
  }
}

module attributes {stable_mosaic.version = 11 : i64} {
  func.func @_linear_kernel(%arg0: i32, %arg1: i32, %arg2: i32, %arg3: memref<16x32xf32, #tpu.memory_space<vmem>>, %arg4: memref<32x32xf32, #tpu.memory_space<vmem>>, %arg5: memref<1x32xf32, #tpu.memory_space<vmem>>, %arg6: memref<16x32xf32, #tpu.memory_space<vmem>>, %arg7: memref<16x32xf32, #tpu.memory_space<vmem>>) attributes {dimension_semantics = [#tpu.dimension_semantics<parallel>, #tpu.dimension_semantics<parallel>, #tpu.dimension_semantics<arbitrary>], iteration_bounds = array<i64: 1, 1, 1>, scalar_prefetch = 0 : i64, scratch_operands = 1 : i64, tpu.core_type = #tpu.core_type<tc>, window_params = [{transform_indices = @transform_0, window_bounds = array<i64: 16, 32>}, {transform_indices = @transform_1, window_bounds = array<i64: 32, 32>}, {transform_indices = @transform_2, window_bounds = array<i64: 1, 32>}, {transform_indices = @transform_3, window_bounds = array<i64: 16, 32>}]} {
    %c0_i32 = arith.constant 0 : i32
    %0 = arith.cmpi eq, %arg2, %c0_i32 : i32
    %1 = arith.extui %0 : i1 to i32
    %c0_i32_0 = arith.constant 0 : i32
    %2 = arith.cmpi ne, %1, %c0_i32_0 : i32
    scf.if %2 {
      %cst_10 = arith.constant 0.000000e+00 : f32
      %12 = vector.broadcast %cst_10 : f32 to vector<16x32xf32>
      %c0_11 = arith.constant 0 : index
      %c0_12 = arith.constant 0 : index
      %13 = vector.load %arg7[%c0_11, %c0_12] : memref<16x32xf32, #tpu.memory_space<vmem>>, vector<16x32xf32>
      tpu.vector_store %arg7[%c0_11, %c0_12], %12 {strides = array<i32>} : memref<16x32xf32, #tpu.memory_space<vmem>>, vector<16x32xf32>,
    } else {
    }
    %c0 = arith.constant 0 : index
    %c0_1 = arith.constant 0 : index
    %3 = vector.load %arg7[%c0, %c0_1] : memref<16x32xf32, #tpu.memory_space<vmem>>, vector<16x32xf32>
    %c0_2 = arith.constant 0 : index
    %c0_3 = arith.constant 0 : index
    %4 = vector.load %arg3[%c0_2, %c0_3] : memref<16x32xf32, #tpu.memory_space<vmem>>, vector<16x32xf32>
    %c0_4 = arith.constant 0 : index
    %c0_5 = arith.constant 0 : index
    %5 = vector.load %arg4[%c0_4, %c0_5] : memref<32x32xf32, #tpu.memory_space<vmem>>, vector<32x32xf32>
    %cst = arith.constant dense<0.000000e+00> : vector<16x32xf32>
    %6 = tpu.matmul %4, %5, %cst {dimension_numbers = #tpu.dot_dimension_numbers<[1], [0], [0], [1], [0, 0, 1, 1], [], []>} : vector<16x32xf32>, vector<32x32xf32>, vector<16x32xf32> -> vector<16x32xf32>
    %7 = arith.addf %3, %6 : vector<16x32xf32>
    %c0_6 = arith.constant 0 : index
    %c0_7 = arith.constant 0 : index
    %8 = vector.load %arg7[%c0_6, %c0_7] : memref<16x32xf32, #tpu.memory_space<vmem>>, vector<16x32xf32>
    tpu.vector_store %arg7[%c0_6, %c0_7], %7 {strides = array<i32>} : memref<16x32xf32, #tpu.memory_space<vmem>>, vector<16x32xf32>,
    %c0_i32_8 = arith.constant 0 : i32
    %9 = arith.cmpi eq, %arg2, %c0_i32_8 : i32
    %10 = arith.extui %9 : i1 to i32
    %c0_i32_9 = arith.constant 0 : i32
    %11 = arith.cmpi ne, %10, %c0_i32_9 : i32
    scf.if %11 {
      %c0_10 = arith.constant 0 : index
      %c0_11 = arith.constant 0 : index
      %12 = vector.load %arg7[%c0_10, %c0_11] : memref<16x32xf32, #tpu.memory_space<vmem>>, vector<16x32xf32>
      %c0_12 = arith.constant 0 : index
      %c0_13 = arith.constant 0 : index
      %13 = vector.load %arg5[%c0_12, %c0_13] : memref<1x32xf32, #tpu.memory_space<vmem>>, vector<1x32xf32>
      %14 = vector.broadcast %13 : vector<1x32xf32> to vector<16x32xf32>
      %15 = arith.addf %12, %14 : vector<16x32xf32>
      %c0_14 = arith.constant 0 : index
      %c0_15 = arith.constant 0 : index
      %16 = vector.load %arg6[%c0_14, %c0_15] : memref<16x32xf32, #tpu.memory_space<vmem>>, vector<16x32xf32>
      tpu.vector_store %arg6[%c0_14, %c0_15], %15 {strides = array<i32>} : memref<16x32xf32, #tpu.memory_space<vmem>>, vector<16x32xf32>,
    } else {
    }
    return
  }
  func.func @transform_0(%arg0: i32, %arg1: i32, %arg2: i32) -> (i32, i32) {
    %c0_i32 = arith.constant 0 : i32
    return %arg0, %arg2 : i32, i32
  }
  func.func @transform_1(%arg0: i32, %arg1: i32, %arg2: i32) -> (i32, i32) {
    %c0_i32 = arith.constant 0 : i32
    return %arg2, %arg1 : i32, i32
  }
  func.func @transform_2(%arg0: i32, %arg1: i32, %arg2: i32) -> (i32, i32) {
    %c0_i32 = arith.constant 0 : i32
    %c0_i32_0 = arith.constant 0 : i32
    return %c0_i32, %arg1 : i32, i32
  }
  func.func @transform_3(%arg0: i32, %arg1: i32, %arg2: i32) -> (i32, i32) {
    %c0_i32 = arith.constant 0 : i32
    return %arg0, %arg1 : i32, i32
  }
}

</mosaic_0001>

<llo_original>
// kernel: _mha_forward_self.5
$region0: #{_mha_forward_self.5}
  #allocation0 [shape = 'u32[]', space=smem, size = 0x4, offset = 0x4, fixed_abs, tag = 'smem constant byte address 0x4 - core index']
  #allocation1 [shape = 'u32[144,128]{1,0:T(1,128)}', space=vmem, size = 0x12000, scoped, tag = 'internal scratch']
  #allocation2 [shape = 'f32[16,32]{1,0:T(8,128)}', space=vmem, size = 0x2000, scoped, tag = 'scratch operand']
  %s0 = inlined_call_operand.vmem [shape: f32[16,32], index: 0, kind: input, shape index: {}]
  %s1 = inlined_call_operand.vmem [shape: f32[32,32], index: 1, kind: input, shape index: {}]
  %s2 = inlined_call_operand.vmem [shape: f32[1,32], index: 2, kind: input, shape index: {}]
  %s3 = inlined_call_operand.hbm [shape: f32[16,32], index: 3, kind: output, shape index: {}]
  %s4 = sld [smem:[#allocation0]]
  $region30: #{_mha_forward_self.5} parent=0
    _
  %s6 = ssub.s32 1, %s4
  %s7 = scalar_select 0, %s6, %s4
  $region1: #{_mha_forward_self.5} parent=0
    #allocation3 [shape = 'u8[8192]{0}', space=vmem, size = 0x2000, scoped, tag = 'output window, operand 0, single buffered']
    #allocation4 [shape = 's32[1]{0}', space=sflag, size = 0x4, scoped, tag = 'scoped memory for _mha_forward_self.5']
    %8 = vsyncpa [#allocation4], 0
    // Predicated region
    $region2: #{_mha_forward_self.5} parent=1 // pred_check
      _
    $region3: #{_mha_forward_self.5} parent=1 // pred_check_branch
      %10 = sbr.rel (0) target = $region5
    $region4: #{_mha_forward_self.5} parent=1 // pred_region
      _
    $region5: #{_mha_forward_self.5} parent=1 // pred_fallthru
      _
    // Predicated region
    $region6: #{_mha_forward_self.5} parent=1 // pred_check
      _
    $region7: #{_mha_forward_self.5} parent=1 // pred_check_branch
      %12 = sbr.rel (0) target = $region9
    $region8: #{_mha_forward_self.5} parent=1 // pred_region
      _
    $region9: #{_mha_forward_self.5} parent=1 // pred_fallthru
      _
    // Predicated region
    $region10: #{_mha_forward_self.5} parent=1 // pred_check
      _
    $region11: #{_mha_forward_self.5} parent=1 // pred_check_branch
      %14 = sbr.rel (0) target = $region13
    $region12: #{_mha_forward_self.5} parent=1 // pred_region
      _
    $region13: #{_mha_forward_self.5} parent=1 // pred_fallthru
      _
    %p15 = scmp.eq.s32.totalorder 0, 0
    // Predicated region
    $region14: #{_mha_forward_self.5} parent=1 // pred_check
      %p16 = pneg %p15
    $region15: #{_mha_forward_self.5} parent=1 // pred_check_branch
      %18 = sbr.rel (%p16) target = $region17
    $region16: #{_mha_forward_self.5} parent=1 // pred_region
      %vm19 = vcmask 261120
      %20 = vst.msk [vmem:[#allocation2] sm:$0xff] %vm19, 0.0
      %21 = vst.msk [vmem:[#allocation2 + $0x8] sm:$0xff] %vm19, 0.0
    $region17: #{_mha_forward_self.5} parent=1 // pred_fallthru
      _
    %v22 = vld [vmem:[#allocation2] sm:$0xff]
    %v23 = vld [vmem:[#allocation2 + $0x8] sm:$0xff]
    %v24 = vld [vmem:[%s0] sm:$0xff]
    %v25 = vld [vmem:[%s0 + $0x8] sm:$0xff]
    %v26 = vld [vmem:[%s1] sm:$0xff]
    %v27 = vld [vmem:[%s1 + $0x8] sm:$0xff]
    %v28 = vld [vmem:[%s1 + $0x10] sm:$0xff]
    %v29 = vld [vmem:[%s1 + $0x18] sm:$0xff]
    %vm30 = vcmask 261120
    %v32 = vsel %vm30, %v24, 0
    %v35 = vsel %vm30, %v25, 0
    %37 = vmatprep.subr.mxu0 0.0
    %38 = vmatpush1.msra.mxu0 %v26
    %39 = vmatprep.subr.mxu0 0.0
    %40 = vmatpush1.msra.mxu0 %v27
    %41 = vmatprep.subr.mxu0 0.0
    %42 = vmatpush1.msra.mxu0 %v28
    %43 = vmatprep.subr.mxu0 0.0
    %44 = vmatpush1.msra.mxu0 %v29
    %45 = vmatprep.subr.mxu0 0.0
    %46 = vmatpush1.msra.mxu0 0.0
    %47 = vmatprep.subr.mxu0 0.0
    %48 = vmatpush1.msra.mxu0 0.0
    %49 = vmatprep.subr.mxu0 0.0
    %50 = vmatpush1.msra.mxu0 0.0
    %51 = vmatprep.subr.mxu0 0.0
    %52 = vmatpush1.msra.mxu0 0.0
    %53 = vmatprep.subr.mxu0 0.0
    %54 = vmatpush1.msra.mxu0 0.0
    %55 = vmatprep.subr.mxu0 0.0
    %56 = vmatpush1.msra.mxu0 0.0
    %57 = vmatprep.subr.mxu0 0.0
    %58 = vmatpush1.msra.mxu0 0.0
    %59 = vmatprep.subr.mxu0 0.0
    %60 = vmatpush1.msra.mxu0 0.0
    %61 = vmatprep.subr.mxu0 0.0
    %62 = vmatpush1.msra.mxu0 0.0
    %63 = vmatprep.subr.mxu0 0.0
    %64 = vmatpush1.msra.mxu0 0.0
    %65 = vmatprep.subr.mxu0 0.0
    %66 = vmatpush1.msra.mxu0 0.0
    %67 = vmatprep.subr.mxu0 0.0
    %68 = vmatpush1.msra.mxu0 0.0
    %69 = vmatprep.subr.mxu0 0.0
    %70 = vmatpush1.msra.mxu0 0.0
    %71 = vmatprep.subr.mxu0 0.0
    %72 = vmatpush1.msra.mxu0 0.0
    %73 = vmatprep.subr.mxu0 0.0
    %74 = vmatpush1.msra.mxu0 0.0
    %75 = vmatprep.subr.mxu0 0.0
    %76 = vmatpush1.msra.mxu0 0.0
    %77 = vmatprep.subr.mxu0 0.0
    %78 = vmatpush1.msra.mxu0 0.0
    %79 = vmatprep.subr.mxu0 0.0
    %80 = vmatpush1.msra.mxu0 0.0
    %81 = vmatprep.subr.mxu0 0.0
    %82 = vmatpush1.msra.mxu0 0.0
    %83 = vmatprep.subr.mxu0 0.0
    %84 = vmatpush1.msra.mxu0 0.0
    %85 = vmatprep.subr.mxu0 0.0
    %86 = vmatpush1.msra.mxu0 0.0
    %87 = vmatprep.subr.mxu0 0.0
    %88 = vmatpush1.msra.mxu0 0.0
    %89 = vmatprep.subr.mxu0 0.0
    %90 = vmatpush1.msra.mxu0 0.0
    %91 = vmatprep.subr.mxu0 0.0
    %92 = vmatpush1.msra.mxu0 0.0
    %93 = vmatprep.subr.mxu0 0.0
    %94 = vmatpush1.msra.mxu0 0.0
    %95 = vmatprep.subr.mxu0 0.0
    %96 = vmatpush1.msra.mxu0 0.0
    %97 = vmatprep.subr.mxu0 0.0
    %98 = vmatpush1.msra.mxu0 0.0
    %99 = vmatprep.subr.mxu0 0.0
    %100 = vmatpush1.msra.mxu0 0.0
    %101 = vmatprep.mubr.f32.mxu0 0.0
    %102 = vmatmul.mubr.f32.gmra.mrb[0].mxu0 %v32
    %v103 = vpop.f32.mrb[0].mxu0
    %v104 = vadd.f32 0.0, %v103
    %v105 = vpop.f32.mrb[0].mxu0
    %106 = vmatprep.mubr.f32.mxu0 0.0
    %107 = vmatmul.mubr.f32.gmra.mrb[0].mxu0 %v35
    %v108 = vpop.f32.mrb[0].mxu0
    %v109 = vadd.f32 0.0, %v108
    %v110 = vpop.f32.mrb[0].mxu0
    %111 = vdwg.mxu0
    %v112 = vadd.f32 %v22, %v104
    %v113 = vadd.f32 %v23, %v109
    %114 = vst.msk [vmem:[#allocation2] sm:$0xff] %vm30, %v112
    %115 = vst.msk [vmem:[#allocation2 + $0x8] sm:$0xff] %vm30, %v113
    // Predicated region
    $region18: #{_mha_forward_self.5} parent=1 // pred_check
      %p116 = pneg %p15
    $region19: #{_mha_forward_self.5} parent=1 // pred_check_branch
      %118 = sbr.rel (%p116) target = $region21
    $region20: #{_mha_forward_self.5} parent=1 // pred_region
      %v119 = vld [vmem:[#allocation2] sm:$0xff]
      %v120 = vld [vmem:[#allocation2 + $0x8] sm:$0xff]
      %v121 = vld [vmem:[%s2] sm:$0x1]
      %v123 = vlaneseq
      %v124 = vshrl.u32 %v123, 7
      %v125 = vsub.s32 0, %v124
      %v126 = vrot.slane %v121, %v125
      %v128 = vadd.f32 %v119, %v126
      %v129 = vadd.f32 %v120, %v126
      %130 = vst.msk [vmem:[#allocation3] sm:$0xff] %vm30, %v128
      %131 = vst.msk [vmem:[#allocation3 + $0x8] sm:$0xff] %vm30, %v129
    $region21: #{_mha_forward_self.5} parent=1 // pred_fallthru
      _
    // Predicated region
    $region22: #{_mha_forward_self.5} parent=1 // pred_check
      _
    $region23: #{_mha_forward_self.5} parent=1 // pred_check_branch
      %133 = sbr.rel (0) target = $region25
    $region24: #{_mha_forward_self.5} parent=1 // pred_region
      %s135 = ssub.s32 256, 256
      %136 = vsyncadd [#allocation4], %s135
      %s137 = sshll.u32 [#allocation3], 4
      %s138 = int_to_ptr.vmem [resolvable:$true] %s137
      %143 = dma.vmem_to_hbm [thread:$0]  %s138, 256, %s3, [#allocation4], 128, 128, 8
    $region25: #{_mha_forward_self.5} parent=1 // pred_fallthru
      _
    // Predicated region
    $region26: #{_mha_forward_self.5} parent=1 // pred_check
      _
    $region27: #{_mha_forward_self.5} parent=1 // pred_check_branch
      %145 = sbr.rel (0) target = $region29
    $region28: #{_mha_forward_self.5} parent=1 // pred_region
      %146 = dma.done [#allocation4], 256
    $region29: #{_mha_forward_self.5} parent=1 // pred_fallthru
      _
    %147 = vsyncpa [#allocation4], 1

// kernel: _mha_forward_self.3
$region0: #{_mha_forward_self.3}
  #allocation0 [shape = 'u32[]', space=smem, size = 0x4, offset = 0x4, fixed_abs, tag = 'smem constant byte address 0x4 - core index']
  #allocation1 [shape = 'u32[144,128]{1,0:T(1,128)}', space=vmem, size = 0x12000, scoped, tag = 'internal scratch']
  #allocation2 [shape = 'f32[16,96]{1,0:T(8,128)}', space=vmem, size = 0x2000, scoped, tag = 'scratch operand']
  %s0 = inlined_call_operand.vmem [shape: f32[16,32], index: 0, kind: input, shape index: {}]
  %s1 = inlined_call_operand.hbm [shape: f32[32,96], index: 1, kind: input, shape index: {}]
  %s2 = inlined_call_operand.vmem [shape: f32[1,96], index: 2, kind: input, shape index: {}]
  %s3 = inlined_call_operand.vmem [shape: f32[16,96], index: 3, kind: output, shape index: {}]
  %s4 = sld [smem:[#allocation0]]
  $region34: #{_mha_forward_self.3} parent=0
    _
  %s6 = ssub.s32 1, %s4
  %s7 = scalar_select 0, %s6, %s4
  $region1: #{_mha_forward_self.3} parent=0
    #allocation3 [shape = 'u8[16384]{0}', space=vmem, size = 0x4000, scoped, tag = 'input window, operand 1, single buffered']
    #allocation4 [shape = 's32[1]{0}', space=sflag, size = 0x4, scoped, tag = 'scoped memory for _mha_forward_self.3']
    %8 = vsyncpa [#allocation4], 0
    // Predicated region
    $region2: #{_mha_forward_self.3} parent=1 // pred_check
      _
    $region3: #{_mha_forward_self.3} parent=1 // pred_check_branch
      %10 = sbr.rel (0) target = $region5
    $region4: #{_mha_forward_self.3} parent=1 // pred_region
      _
    $region5: #{_mha_forward_self.3} parent=1 // pred_fallthru
      _
    // Predicated region
    $region6: #{_mha_forward_self.3} parent=1 // pred_check
      _
    $region7: #{_mha_forward_self.3} parent=1 // pred_check_branch
      %12 = sbr.rel (0) target = $region9
    $region8: #{_mha_forward_self.3} parent=1 // pred_region
      %s14 = ssub.s32 512, 512
      %15 = vsyncadd [#allocation4], %s14
      %s16 = sshll.u32 [#allocation3], 4
      %s17 = int_to_ptr.vmem [resolvable:$true] %s16
      %22 = dma.hbm_to_vmem [thread:$0]  %s1, 512, %s17, [#allocation4], 128, 128, 8
    $region9: #{_mha_forward_self.3} parent=1 // pred_fallthru
      _
    // Predicated region
    $region10: #{_mha_forward_self.3} parent=1 // pred_check
      _
    $region11: #{_mha_forward_self.3} parent=1 // pred_check_branch
      %24 = sbr.rel (0) target = $region13
    $region12: #{_mha_forward_self.3} parent=1 // pred_region
      _
    $region13: #{_mha_forward_self.3} parent=1 // pred_fallthru
      _
    // Predicated region
    $region14: #{_mha_forward_self.3} parent=1 // pred_check
      _
    $region15: #{_mha_forward_self.3} parent=1 // pred_check_branch
      %26 = sbr.rel (0) target = $region17
    $region16: #{_mha_forward_self.3} parent=1 // pred_region
      %27 = dma.done [#allocation4], 512
    $region17: #{_mha_forward_self.3} parent=1 // pred_fallthru
      _
    %p28 = scmp.eq.s32.totalorder 0, 0
    // Predicated region
    $region18: #{_mha_forward_self.3} parent=1 // pred_check
      %p29 = pneg %p28
    $region19: #{_mha_forward_self.3} parent=1 // pred_check_branch
      %31 = sbr.rel (%p29) target = $region21
    $region20: #{_mha_forward_self.3} parent=1 // pred_region
      %vm32 = vcmask 785408
      %33 = vst.msk [vmem:[#allocation2] sm:$0xff] %vm32, 0.0
      %34 = vst.msk [vmem:[#allocation2 + $0x8] sm:$0xff] %vm32, 0.0
    $region21: #{_mha_forward_self.3} parent=1 // pred_fallthru
      _
    %v35 = vld [vmem:[#allocation2] sm:$0xff]
    %v36 = vld [vmem:[#allocation2 + $0x8] sm:$0xff]
    %v37 = vld [vmem:[%s0] sm:$0xff]
    %v38 = vld [vmem:[%s0 + $0x8] sm:$0xff]
    %v39 = vld [vmem:[#allocation3] sm:$0xff]
    %v40 = vld [vmem:[#allocation3 + $0x8] sm:$0xff]
    %v41 = vld [vmem:[#allocation3 + $0x10] sm:$0xff]
    %v42 = vld [vmem:[#allocation3 + $0x18] sm:$0xff]
    %vm43 = vcmask 261120
    %v45 = vsel %vm43, %v37, 0
    %v48 = vsel %vm43, %v38, 0
    %50 = vmatprep.subr.mxu0 0.0
    %51 = vmatpush1.msra.mxu0 %v39
    %52 = vmatprep.subr.mxu0 0.0
    %53 = vmatpush1.msra.mxu0 %v40
    %54 = vmatprep.subr.mxu0 0.0
    %55 = vmatpush1.msra.mxu0 %v41
    %56 = vmatprep.subr.mxu0 0.0
    %57 = vmatpush1.msra.mxu0 %v42
    %58 = vmatprep.subr.mxu0 0.0
    %59 = vmatpush1.msra.mxu0 0.0
    %60 = vmatprep.subr.mxu0 0.0
    %61 = vmatpush1.msra.mxu0 0.0
    %62 = vmatprep.subr.mxu0 0.0
    %63 = vmatpush1.msra.mxu0 0.0
    %64 = vmatprep.subr.mxu0 0.0
    %65 = vmatpush1.msra.mxu0 0.0
    %66 = vmatprep.subr.mxu0 0.0
    %67 = vmatpush1.msra.mxu0 0.0
    %68 = vmatprep.subr.mxu0 0.0
    %69 = vmatpush1.msra.mxu0 0.0
    %70 = vmatprep.subr.mxu0 0.0
    %71 = vmatpush1.msra.mxu0 0.0
    %72 = vmatprep.subr.mxu0 0.0
    %73 = vmatpush1.msra.mxu0 0.0
    %74 = vmatprep.subr.mxu0 0.0
    %75 = vmatpush1.msra.mxu0 0.0
    %76 = vmatprep.subr.mxu0 0.0
    %77 = vmatpush1.msra.mxu0 0.0
    %78 = vmatprep.subr.mxu0 0.0
    %79 = vmatpush1.msra.mxu0 0.0
    %80 = vmatprep.subr.mxu0 0.0
    %81 = vmatpush1.msra.mxu0 0.0
    %82 = vmatprep.subr.mxu0 0.0
    %83 = vmatpush1.msra.mxu0 0.0
    %84 = vmatprep.subr.mxu0 0.0
    %85 = vmatpush1.msra.mxu0 0.0
    %86 = vmatprep.subr.mxu0 0.0
    %87 = vmatpush1.msra.mxu0 0.0
    %88 = vmatprep.subr.mxu0 0.0
    %89 = vmatpush1.msra.mxu0 0.0
    %90 = vmatprep.subr.mxu0 0.0
    %91 = vmatpush1.msra.mxu0 0.0
    %92 = vmatprep.subr.mxu0 0.0
    %93 = vmatpush1.msra.mxu0 0.0
    %94 = vmatprep.subr.mxu0 0.0
    %95 = vmatpush1.msra.mxu0 0.0
    %96 = vmatprep.subr.mxu0 0.0
    %97 = vmatpush1.msra.mxu0 0.0
    %98 = vmatprep.subr.mxu0 0.0
    %99 = vmatpush1.msra.mxu0 0.0
    %100 = vmatprep.subr.mxu0 0.0
    %101 = vmatpush1.msra.mxu0 0.0
    %102 = vmatprep.subr.mxu0 0.0
    %103 = vmatpush1.msra.mxu0 0.0
    %104 = vmatprep.subr.mxu0 0.0
    %105 = vmatpush1.msra.mxu0 0.0
    %106 = vmatprep.subr.mxu0 0.0
    %107 = vmatpush1.msra.mxu0 0.0
    %108 = vmatprep.subr.mxu0 0.0
    %109 = vmatpush1.msra.mxu0 0.0
    %110 = vmatprep.subr.mxu0 0.0
    %111 = vmatpush1.msra.mxu0 0.0
    %112 = vmatprep.subr.mxu0 0.0
    %113 = vmatpush1.msra.mxu0 0.0
    %114 = vmatprep.mubr.f32.mxu0 0.0
    %115 = vmatmul.mubr.f32.gmra.mrb[0].mxu0 %v45
    %v116 = vpop.f32.mrb[0].mxu0
    %v117 = vadd.f32 0.0, %v116
    %v118 = vpop.f32.mrb[0].mxu0
    %119 = vmatprep.mubr.f32.mxu0 0.0
    %120 = vmatmul.mubr.f32.gmra.mrb[0].mxu0 %v48
    %v121 = vpop.f32.mrb[0].mxu0
    %v122 = vadd.f32 0.0, %v121
    %v123 = vpop.f32.mrb[0].mxu0
    %124 = vdwg.mxu0
    %v125 = vadd.f32 %v35, %v117
    %v126 = vadd.f32 %v36, %v122
    %vm127 = vcmask 785408
    %128 = vst.msk [vmem:[#allocation2] sm:$0xff] %vm127, %v125
    %129 = vst.msk [vmem:[#allocation2 + $0x8] sm:$0xff] %vm127, %v126
    // Predicated region
    $region22: #{_mha_forward_self.3} parent=1 // pred_check
      %p130 = pneg %p28
    $region23: #{_mha_forward_self.3} parent=1 // pred_check_branch
      %132 = sbr.rel (%p130) target = $region25
    $region24: #{_mha_forward_self.3} parent=1 // pred_region
      %v133 = vld [vmem:[#allocation2] sm:$0xff]
      %v134 = vld [vmem:[#allocation2 + $0x8] sm:$0xff]
      %v135 = vld [vmem:[%s2] sm:$0x1]
      %v137 = vlaneseq
      %v138 = vshrl.u32 %v137, 7
      %v139 = vsub.s32 0, %v138
      %v140 = vrot.slane %v135, %v139
      %v142 = vadd.f32 %v133, %v140
      %v143 = vadd.f32 %v134, %v140
      %144 = vst.msk [vmem:[%s3] sm:$0xff] %vm127, %v142
      %145 = vst.msk [vmem:[%s3 + $0x8] sm:$0xff] %vm127, %v143
    $region25: #{_mha_forward_self.3} parent=1 // pred_fallthru
      _
    // Predicated region
    $region26: #{_mha_forward_self.3} parent=1 // pred_check
      _
    $region27: #{_mha_forward_self.3} parent=1 // pred_check_branch
      %147 = sbr.rel (0) target = $region29
    $region28: #{_mha_forward_self.3} parent=1 // pred_region
      _
    $region29: #{_mha_forward_self.3} parent=1 // pred_fallthru
      _
    // Predicated region
    $region30: #{_mha_forward_self.3} parent=1 // pred_check
      _
    $region31: #{_mha_forward_self.3} parent=1 // pred_check_branch
      %149 = sbr.rel (0) target = $region33
    $region32: #{_mha_forward_self.3} parent=1 // pred_region
      _
    $region33: #{_mha_forward_self.3} parent=1 // pred_fallthru
      _
    %150 = vsyncpa [#allocation4], 1

// kernel: _mha_forward_self.4
$region0: #{_mha_forward_self.4}
  #allocation0 [shape = 'u32[]', space=smem, size = 0x4, offset = 0x4, fixed_abs, tag = 'smem constant byte address 0x4 - core index']
  #allocation1 [shape = 'u32[144,128]{1,0:T(1,128)}', space=vmem, size = 0x12000, scoped, tag = 'internal scratch']
  %s0 = inlined_call_operand.vmem [shape: f32[2,8,96], index: 0, kind: input, shape index: {}]
  %s1 = inlined_call_operand.vmem [shape: f32[1,8,8], index: 1, kind: input, shape index: {}]
  %s2 = inlined_call_operand.vmem [shape: f32[2,8,32], index: 2, kind: output, shape index: {}]
  %s3 = sld [smem:[#allocation0]]
  $region41: #{_mha_forward_self.4} parent=0
    _
  %s5 = ssub.s32 1, %s3
  %s6 = scalar_select 0, %s5, %s3
  loop: start=0, step=1, limit=4
  $region2: #{_mha_forward_self.4} parent=0 // loop_pre_header
    _
  $region3: #{_mha_forward_self.4} parent=0 // loop_header
    %s8 = sphi 0, %s12
    %p9 = scmp.ge.s32.totalorder %s8, 4
    %s18 = sphi 0, %s20
    %s21 = sphi 0, %s18
    %s22 = sphi 0, %s21
    %s38 = sphi 0, %s22
    %s42 = sphi 0, %s42
    %s44 = sphi 0, %s42
    %s45 = sphi 0, %s44
    %s59 = sphi 0, %s45
    %s65 = sphi 0, %s67
    %s68 = sphi 0, %s65
    %s69 = sphi 0, %s68
    %s85 = sphi 0, %s69
  $region4: #{_mha_forward_self.4} parent=0 // loop_header_branch
    %11 = sbr.rel (%p9) target = $region8
  $region5: #{_mha_forward_self.4} parent=0 // loop_body
    %s13 = ssub.s32 %s8, 1
    %s14 = ssub.s32 %s8, 2
    %s15 = sadd.s32 %s8, 1
    %s16 = ssub.s32 %s8, %s15
    %p17 = scmp.eq.s32.totalorder %s16, 0
    %s19 = sadd.s32 %s18, 1
    %s20 = scalar_select %p17, %s18, %s19
    %p23 = pneg %p17
    %p24 = scmp.eq.s32.totalorder %s8, 1
    %p25 = por %p23, %p24
    %p26 = scmp.ne.s32.totalorder %s18, %s21
    %p27 = scmp.eq.s32.totalorder %s8, 0
    %p28 = por %p26, %p27
    %p29 = scmp.ne.s32.totalorder %s18, %s21
    %p30 = scmp.eq.s32.totalorder %s13, 1
    %p31 = por %p29, %p30
    %p32 = scmp.ne.s32.totalorder %s21, %s22
    %p33 = scmp.eq.s32.totalorder %s13, 0
    %p34 = por %p32, %p33
    %p35 = scmp.ne.s32.totalorder %s21, %s22
    %p36 = scmp.eq.s32.totalorder %s14, 1
    %p37 = por %p35, %p36
    %p39 = scmp.ne.s32.totalorder %s22, %s38
    %p40 = scmp.eq.s32.totalorder %s14, 0
    %p41 = por %p39, %p40
    %s43 = sadd.s32 %s42, 1
    %p46 = scmp.eq.s32.totalorder %s8, 1
    %p47 = scmp.ne.s32.totalorder %s42, %s44
    %p48 = scmp.eq.s32.totalorder %s8, 0
    %p49 = por %p47, %p48
    %p50 = scmp.ne.s32.totalorder %s42, %s44
    %p51 = scmp.eq.s32.totalorder %s13, 1
    %p52 = por %p50, %p51
    %p53 = scmp.ne.s32.totalorder %s44, %s45
    %p54 = scmp.eq.s32.totalorder %s13, 0
    %p55 = por %p53, %p54
    %p56 = scmp.ne.s32.totalorder %s44, %s45
    %p57 = scmp.eq.s32.totalorder %s14, 1
    %p58 = por %p56, %p57
    %p60 = scmp.ne.s32.totalorder %s45, %s59
    %p61 = scmp.eq.s32.totalorder %s14, 0
    %p62 = por %p60, %p61
    %s63 = ssub.s32 %s8, %s15
    %p64 = scmp.eq.s32.totalorder %s63, 0
    %s66 = sadd.s32 %s65, 1
    %s67 = scalar_select %p64, %s65, %s66
    %p70 = pneg %p64
    %p71 = scmp.eq.s32.totalorder %s8, 1
    %p72 = por %p70, %p71
    %p73 = scmp.ne.s32.totalorder %s65, %s68
    %p74 = scmp.eq.s32.totalorder %s8, 0
    %p75 = por %p73, %p74
    %p76 = scmp.ne.s32.totalorder %s65, %s68
    %p77 = scmp.eq.s32.totalorder %s13, 1
    %p78 = por %p76, %p77
    %p79 = scmp.ne.s32.totalorder %s68, %s69
    %p80 = scmp.eq.s32.totalorder %s13, 0
    %p81 = por %p79, %p80
    %p82 = scmp.ne.s32.totalorder %s68, %s69
    %p83 = scmp.eq.s32.totalorder %s14, 1
    %p84 = por %p82, %p83
    %p86 = scmp.ne.s32.totalorder %s69, %s85
    %p87 = scmp.eq.s32.totalorder %s14, 0
    %p88 = por %p86, %p87
    %p89 = scmp.le.s32.totalorder 1, %s8
    %p90 = scmp.lt.s32.totalorder %s8, 3
    %p91 = pnand %p89, %p90
    %p92 = pneg %p91
    // Predicated region
    $region9: #{_mha_forward_self.4} parent=5 // pred_check
      _
    $region10: #{_mha_forward_self.4} parent=5 // pred_check_branch
      %94 = sbr.rel (%p91) target = $region12
    $region11: #{_mha_forward_self.4} parent=5 // pred_region
      %s95 = ssub.s32 %s8, 1
      // Predicated region
      $region13: #{_mha_forward_self.4} parent=11 // pred_check
        %p96 = pneg %p55
      $region14: #{_mha_forward_self.4} parent=11 // pred_check_branch
        %98 = sbr.rel (%p96) target = $region16
      $region15: #{_mha_forward_self.4} parent=11 // pred_region
        _
      $region16: #{_mha_forward_self.4} parent=11 // pred_fallthru
        _
    $region12: #{_mha_forward_self.4} parent=5 // pred_fallthru
      _
    %p99 = scmp.lt.s32.totalorder %s8, 2
    // Predicated region
    $region17: #{_mha_forward_self.4} parent=5 // pred_check
      %p100 = pneg %p99
    $region18: #{_mha_forward_self.4} parent=5 // pred_check_branch
      %102 = sbr.rel (%p100) target = $region20
    $region19: #{_mha_forward_self.4} parent=5 // pred_region
      // Predicated region
      $region21: #{_mha_forward_self.4} parent=19 // pred_check
        %p103 = pneg %p28
      $region22: #{_mha_forward_self.4} parent=19 // pred_check_branch
        %105 = sbr.rel (%p103) target = $region24
      $region23: #{_mha_forward_self.4} parent=19 // pred_region
        %p106 = scmp.lt.s32.totalorder %s8, 1
        %s107 = scalar_select %p106, %s8, 1
        %s108 = smul.addr %s107, 8
        %s109 = scalar_lea.vmem %s0, %s108
      $region24: #{_mha_forward_self.4} parent=19 // pred_fallthru
        _
    $region20: #{_mha_forward_self.4} parent=5 // pred_fallthru
      _
    %p110 = scmp.le.s32.totalorder 1, %s8
    %p111 = scmp.lt.s32.totalorder %s8, 3
    %p112 = pnand %p110, %p111
    %p113 = pneg %p112
    // Predicated region
    $region25: #{_mha_forward_self.4} parent=5 // pred_check
      _
    $region26: #{_mha_forward_self.4} parent=5 // pred_check_branch
      %115 = sbr.rel (%p112) target = $region28
    $region27: #{_mha_forward_self.4} parent=5 // pred_region
      %s116 = ssub.s32 %s8, 1
      %p117 = scmp.lt.s32.totalorder %s13, 1
      %s118 = scalar_select %p117, %s13, 1
      %s119 = smul.addr %s118, 8
      %s120 = scalar_lea.vmem %s0, %s119
      %p121 = pneg %p34
      %p122 = pneg %p31
      %p123 = pneg %p55
      %p124 = pneg %p52
      %p125 = pneg %p81
      %p126 = pneg %p78
      %p127 = scmp.lt.s32.totalorder %s13, 1
      %s128 = scalar_select %p127, %s13, 1
      %s129 = smul.addr %s128, 8
      %s130 = scalar_lea.vmem %s2, %s129
      %p131 = scmp.lt.s32.totalorder %s13, 1
      %s132 = scalar_select %p131, %s13, 1
      %s133 = smul.addr %s132, 8
      %s134 = scalar_lea.vmem %s0, %s133
      %p135 = scmp.lt.s32.totalorder %s13, 1
      %s136 = scalar_select %p135, %s13, 1
      %s137 = smul.addr %s136, 8
      %s138 = scalar_lea.vmem %s2, %s137
      %v139 = vld [vmem:[%s1] sm:$0xff]
      %v140 = vmul.f32 %v139, -1e+09
      %v141 = vld [vmem:[%s134] sm:$0xff]
      %v142 = vmul.f32 %v141, 0.35355338
      %144 = vrot.lane.b32.xlu0 %v141, 96
      %v145 = vpop.permute.xlu0 %144
      %vm146 = vcmask 64512
      %v148 = vsel %vm146, %v142, 0
      %v150 = vsel %vm146, %v145, 0
      %152 = vmatprep.subr.mxu0 0.0
      %153 = vmatpush1.xpose.msra.mxu0 %v150
      %154 = vmatprep.subr.mxu0 0.0
      %155 = vmatpush1.xpose.msra.mxu0 0.0
      %156 = vmatprep.subr.mxu0 0.0
      %157 = vmatpush1.xpose.msra.mxu0 0.0
      %158 = vmatprep.subr.mxu0 0.0
      %159 = vmatpush1.xpose.msra.mxu0 0.0
      %160 = vmatprep.subr.mxu0 0.0
      %161 = vmatpush1.xpose.msra.mxu0 0.0
      %162 = vmatprep.subr.mxu0 0.0
      %163 = vmatpush1.xpose.msra.mxu0 0.0
      %164 = vmatprep.subr.mxu0 0.0
      %165 = vmatpush1.xpose.msra.mxu0 0.0
      %166 = vmatprep.subr.mxu0 0.0
      %167 = vmatpush1.xpose.msra.mxu0 0.0
      %168 = vmatprep.subr.mxu0 0.0
      %169 = vmatpush1.xpose.msra.mxu0 0.0
      %170 = vmatprep.subr.mxu0 0.0
      %171 = vmatpush1.xpose.msra.mxu0 0.0
      %172 = vmatprep.subr.mxu0 0.0
      %173 = vmatpush1.xpose.msra.mxu0 0.0
      %174 = vmatprep.subr.mxu0 0.0
      %175 = vmatpush1.xpose.msra.mxu0 0.0
      %176 = vmatprep.subr.mxu0 0.0
      %177 = vmatpush1.xpose.msra.mxu0 0.0
      %178 = vmatprep.subr.mxu0 0.0
      %179 = vmatpush1.xpose.msra.mxu0 0.0
      %180 = vmatprep.subr.mxu0 0.0
      %181 = vmatpush1.xpose.msra.mxu0 0.0
      %182 = vmatprep.subr.mxu0 0.0
      %183 = vmatpush1.xpose.msra.mxu0 0.0
      %184 = vmatprep.subr.mxu0 0.0
      %185 = vmatpush1.xpose.msra.mxu0 0.0
      %186 = vmatprep.subr.mxu0 0.0
      %187 = vmatpush1.xpose.msra.mxu0 0.0
      %188 = vmatprep.subr.mxu0 0.0
      %189 = vmatpush1.xpose.msra.mxu0 0.0
      %190 = vmatprep.subr.mxu0 0.0
      %191 = vmatpush1.xpose.msra.mxu0 0.0
      %192 = vmatprep.subr.mxu0 0.0
      %193 = vmatpush1.xpose.msra.mxu0 0.0
      %194 = vmatprep.subr.mxu0 0.0
      %195 = vmatpush1.xpose.msra.mxu0 0.0
      %196 = vmatprep.subr.mxu0 0.0
      %197 = vmatpush1.xpose.msra.mxu0 0.0
      %198 = vmatprep.subr.mxu0 0.0
      %199 = vmatpush1.xpose.msra.mxu0 0.0
      %200 = vmatprep.subr.mxu0 0.0
      %201 = vmatpush1.xpose.msra.mxu0 0.0
      %202 = vmatprep.subr.mxu0 0.0
      %203 = vmatpush1.xpose.msra.mxu0 0.0
      %204 = vmatprep.subr.mxu0 0.0
      %205 = vmatpush1.xpose.msra.mxu0 0.0
      %206 = vmatprep.subr.mxu0 0.0
      %207 = vmatpush1.xpose.msra.mxu0 0.0
      %208 = vmatprep.subr.mxu0 0.0
      %209 = vmatpush1.xpose.msra.mxu0 0.0
      %210 = vmatprep.subr.mxu0 0.0
      %211 = vmatpush1.xpose.msra.mxu0 0.0
      %212 = vmatprep.subr.mxu0 0.0
      %213 = vmatpush1.xpose.msra.mxu0 0.0
      %214 = vmatprep.subr.mxu0 0.0
      %215 = vmatpush1.xpose.msra.mxu0 0.0
      %216 = vmatprep.mubr.f32.mxu0 0.0
      %217 = vmatmul.mubr.f32.gmra.mrb[0].mxu0 %v148
      %v218 = vpop.f32.mrb[0].mxu0
      %v219 = vadd.f32 %v140, %v218
      %v220 = vpop.f32.mrb[0].mxu0
      %221 = vdwg.mxu0
      %v222 = vsel %vm146, %v219, -inf
      %223 = vmax.xlane.f32.xlu0 %v222
      %v224 = vpop.xlane.xlu0 %223
      %v225 = vsub.f32 %v219, %v224
      %v226 = vmul.f32 %v225, 1.442695
      %v227 = vpow.pop %v226
      %v228 = vsel %vm146, %v227, 0.0
      %229 = vadd.xlane.f32.xlu0 %v228
      %v230 = vpop.xlane.xlu0 %229
      %v231 = vrcp.pop %v230
      %v232 = vmul.f32 %v227, %v231
      %233 = vrot.lane.b32.xlu0 %v141, 64
      %v234 = vpop.permute.xlu0 %233
      %v237 = vsel %vm146, %v232, 0
      %239 = vmatprep.subr.mxu0 0.0
      %240 = vmatpush1.msra.mxu0 %v234
      %241 = vmatprep.subr.mxu0 0.0
      %242 = vmatpush1.msra.mxu0 0.0
      %243 = vmatprep.subr.mxu0 0.0
      %244 = vmatpush1.msra.mxu0 0.0
      %245 = vmatprep.subr.mxu0 0.0
      %246 = vmatpush1.msra.mxu0 0.0
      %247 = vmatprep.subr.mxu0 0.0
      %248 = vmatpush1.msra.mxu0 0.0
      %249 = vmatprep.subr.mxu0 0.0
      %250 = vmatpush1.msra.mxu0 0.0
      %251 = vmatprep.subr.mxu0 0.0
      %252 = vmatpush1.msra.mxu0 0.0
      %253 = vmatprep.subr.mxu0 0.0
      %254 = vmatpush1.msra.mxu0 0.0
      %255 = vmatprep.subr.mxu0 0.0
      %256 = vmatpush1.msra.mxu0 0.0
      %257 = vmatprep.subr.mxu0 0.0
      %258 = vmatpush1.msra.mxu0 0.0
      %259 = vmatprep.subr.mxu0 0.0
      %260 = vmatpush1.msra.mxu0 0.0
      %261 = vmatprep.subr.mxu0 0.0
      %262 = vmatpush1.msra.mxu0 0.0
      %263 = vmatprep.subr.mxu0 0.0
      %264 = vmatpush1.msra.mxu0 0.0
      %265 = vmatprep.subr.mxu0 0.0
      %266 = vmatpush1.msra.mxu0 0.0
      %267 = vmatprep.subr.mxu0 0.0
      %268 = vmatpush1.msra.mxu0 0.0
      %269 = vmatprep.subr.mxu0 0.0
      %270 = vmatpush1.msra.mxu0 0.0
      %271 = vmatprep.subr.mxu0 0.0
      %272 = vmatpush1.msra.mxu0 0.0
      %273 = vmatprep.subr.mxu0 0.0
      %274 = vmatpush1.msra.mxu0 0.0
      %275 = vmatprep.subr.mxu0 0.0
      %276 = vmatpush1.msra.mxu0 0.0
      %277 = vmatprep.subr.mxu0 0.0
      %278 = vmatpush1.msra.mxu0 0.0
      %279 = vmatprep.subr.mxu0 0.0
      %280 = vmatpush1.msra.mxu0 0.0
      %281 = vmatprep.subr.mxu0 0.0
      %282 = vmatpush1.msra.mxu0 0.0
      %283 = vmatprep.subr.mxu0 0.0
      %284 = vmatpush1.msra.mxu0 0.0
      %285 = vmatprep.subr.mxu0 0.0
      %286 = vmatpush1.msra.mxu0 0.0
      %287 = vmatprep.subr.mxu0 0.0
      %288 = vmatpush1.msra.mxu0 0.0
      %289 = vmatprep.subr.mxu0 0.0
      %290 = vmatpush1.msra.mxu0 0.0
      %291 = vmatprep.subr.mxu0 0.0
      %292 = vmatpush1.msra.mxu0 0.0
      %293 = vmatprep.subr.mxu0 0.0
      %294 = vmatpush1.msra.mxu0 0.0
      %295 = vmatprep.subr.mxu0 0.0
      %296 = vmatpush1.msra.mxu0 0.0
      %297 = vmatprep.subr.mxu0 0.0
      %298 = vmatpush1.msra.mxu0 0.0
      %299 = vmatprep.subr.mxu0 0.0
      %300 = vmatpush1.msra.mxu0 0.0
      %301 = vmatprep.subr.mxu0 0.0
      %302 = vmatpush1.msra.mxu0 0.0
      %303 = vmatprep.mubr.f32.mxu0 0.0
      %304 = vmatmul.mubr.f32.gmra.mrb[0].mxu0 %v237
      %v305 = vpop.f32.mrb[0].mxu0
      %v306 = vadd.f32 0.0, %v305
      %v307 = vpop.f32.mrb[0].mxu0
      %308 = vdwg.mxu0
      %309 = vst.msk [vmem:[%s138] sm:$0xff] %vm146, %v306
      %v310 = vld [vmem:[%s134] sm:$0xff]
      %v311 = vmul.f32 %v310, 0.35355338
      %313 = vrot.lane.b32.xlu0 %v311, 120
      %v314 = vpop.permute.xlu0 %313
      %316 = vrot.lane.b32.xlu0 %v310, 88
      %v317 = vpop.permute.xlu0 %316
      %v318 = vsel %vm146, %v314, 0
      %v320 = vsel %vm146, %v317, 0
      %322 = vmatprep.subr.mxu0 0.0
      %323 = vmatpush1.xpose.msra.mxu0 %v320
      %324 = vmatprep.subr.mxu0 0.0
      %325 = vmatpush1.xpose.msra.mxu0 0.0
      %326 = vmatprep.subr.mxu0 0.0
      %327 = vmatpush1.xpose.msra.mxu0 0.0
      %328 = vmatprep.subr.mxu0 0.0
      %329 = vmatpush1.xpose.msra.mxu0 0.0
      %330 = vmatprep.subr.mxu0 0.0
      %331 = vmatpush1.xpose.msra.mxu0 0.0
      %332 = vmatprep.subr.mxu0 0.0
      %333 = vmatpush1.xpose.msra.mxu0 0.0
      %334 = vmatprep.subr.mxu0 0.0
      %335 = vmatpush1.xpose.msra.mxu0 0.0
      %336 = vmatprep.subr.mxu0 0.0
      %337 = vmatpush1.xpose.msra.mxu0 0.0
      %338 = vmatprep.subr.mxu0 0.0
      %339 = vmatpush1.xpose.msra.mxu0 0.0
      %340 = vmatprep.subr.mxu0 0.0
      %341 = vmatpush1.xpose.msra.mxu0 0.0
      %342 = vmatprep.subr.mxu0 0.0
      %343 = vmatpush1.xpose.msra.mxu0 0.0
      %344 = vmatprep.subr.mxu0 0.0
      %345 = vmatpush1.xpose.msra.mxu0 0.0
      %346 = vmatprep.subr.mxu0 0.0
      %347 = vmatpush1.xpose.msra.mxu0 0.0
      %348 = vmatprep.subr.mxu0 0.0
      %349 = vmatpush1.xpose.msra.mxu0 0.0
      %350 = vmatprep.subr.mxu0 0.0
      %351 = vmatpush1.xpose.msra.mxu0 0.0
      %352 = vmatprep.subr.mxu0 0.0
      %353 = vmatpush1.xpose.msra.mxu0 0.0
      %354 = vmatprep.subr.mxu0 0.0
      %355 = vmatpush1.xpose.msra.mxu0 0.0
      %356 = vmatprep.subr.mxu0 0.0
      %357 = vmatpush1.xpose.msra.mxu0 0.0
      %358 = vmatprep.subr.mxu0 0.0
      %359 = vmatpush1.xpose.msra.mxu0 0.0
      %360 = vmatprep.subr.mxu0 0.0
      %361 = vmatpush1.xpose.msra.mxu0 0.0
      %362 = vmatprep.subr.mxu0 0.0
      %363 = vmatpush1.xpose.msra.mxu0 0.0
      %364 = vmatprep.subr.mxu0 0.0
      %365 = vmatpush1.xpose.msra.mxu0 0.0
      %366 = vmatprep.subr.mxu0 0.0
      %367 = vmatpush1.xpose.msra.mxu0 0.0
      %368 = vmatprep.subr.mxu0 0.0
      %369 = vmatpush1.xpose.msra.mxu0 0.0
      %370 = vmatprep.subr.mxu0 0.0
      %371 = vmatpush1.xpose.msra.mxu0 0.0
      %372 = vmatprep.subr.mxu0 0.0
      %373 = vmatpush1.xpose.msra.mxu0 0.0
      %374 = vmatprep.subr.mxu0 0.0
      %375 = vmatpush1.xpose.msra.mxu0 0.0
      %376 = vmatprep.subr.mxu0 0.0
      %377 = vmatpush1.xpose.msra.mxu0 0.0
      %378 = vmatprep.subr.mxu0 0.0
      %379 = vmatpush1.xpose.msra.mxu0 0.0
      %380 = vmatprep.subr.mxu0 0.0
      %381 = vmatpush1.xpose.msra.mxu0 0.0
      %382 = vmatprep.subr.mxu0 0.0
      %383 = vmatpush1.xpose.msra.mxu0 0.0
      %384 = vmatprep.subr.mxu0 0.0
      %385 = vmatpush1.xpose.msra.mxu0 0.0
      %386 = vmatprep.mubr.f32.mxu0 0.0
      %387 = vmatmul.mubr.f32.gmra.mrb[0].mxu0 %v318
      %v388 = vpop.f32.mrb[0].mxu0
      %v389 = vadd.f32 %v140, %v388
      %v390 = vpop.f32.mrb[0].mxu0
      %391 = vdwg.mxu0
      %v392 = vsel %vm146, %v389, -inf
      %393 = vmax.xlane.f32.xlu0 %v392
      %v394 = vpop.xlane.xlu0 %393
      %v395 = vsub.f32 %v389, %v394
      %v396 = vmul.f32 %v395, 1.442695
      %v397 = vpow.pop %v396
      %v398 = vsel %vm146, %v397, 0.0
      %399 = vadd.xlane.f32.xlu0 %v398
      %v400 = vpop.xlane.xlu0 %399
      %v401 = vrcp.pop %v400
      %v402 = vmul.f32 %v397, %v401
      %403 = vrot.lane.b32.xlu0 %v310, 56
      %v404 = vpop.permute.xlu0 %403
      %v407 = vsel %vm146, %v402, 0
      %409 = vmatprep.subr.mxu0 0.0
      %410 = vmatpush1.msra.mxu0 %v404
      %411 = vmatprep.subr.mxu0 0.0
      %412 = vmatpush1.msra.mxu0 0.0
      %413 = vmatprep.subr.mxu0 0.0
      %414 = vmatpush1.msra.mxu0 0.0
      %415 = vmatprep.subr.mxu0 0.0
      %416 = vmatpush1.msra.mxu0 0.0
      %417 = vmatprep.subr.mxu0 0.0
      %418 = vmatpush1.msra.mxu0 0.0
      %419 = vmatprep.subr.mxu0 0.0
      %420 = vmatpush1.msra.mxu0 0.0
      %421 = vmatprep.subr.mxu0 0.0
      %422 = vmatpush1.msra.mxu0 0.0
      %423 = vmatprep.subr.mxu0 0.0
      %424 = vmatpush1.msra.mxu0 0.0
      %425 = vmatprep.subr.mxu0 0.0
      %426 = vmatpush1.msra.mxu0 0.0
      %427 = vmatprep.subr.mxu0 0.0
      %428 = vmatpush1.msra.mxu0 0.0
      %429 = vmatprep.subr.mxu0 0.0
      %430 = vmatpush1.msra.mxu0 0.0
      %431 = vmatprep.subr.mxu0 0.0
      %432 = vmatpush1.msra.mxu0 0.0
      %433 = vmatprep.subr.mxu0 0.0
      %434 = vmatpush1.msra.mxu0 0.0
      %435 = vmatprep.subr.mxu0 0.0
      %436 = vmatpush1.msra.mxu0 0.0
      %437 = vmatprep.subr.mxu0 0.0
      %438 = vmatpush1.msra.mxu0 0.0
      %439 = vmatprep.subr.mxu0 0.0
      %440 = vmatpush1.msra.mxu0 0.0
      %441 = vmatprep.subr.mxu0 0.0
      %442 = vmatpush1.msra.mxu0 0.0
      %443 = vmatprep.subr.mxu0 0.0
      %444 = vmatpush1.msra.mxu0 0.0
      %445 = vmatprep.subr.mxu0 0.0
      %446 = vmatpush1.msra.mxu0 0.0
      %447 = vmatprep.subr.mxu0 0.0
      %448 = vmatpush1.msra.mxu0 0.0
      %449 = vmatprep.subr.mxu0 0.0
      %450 = vmatpush1.msra.mxu0 0.0
      %451 = vmatprep.subr.mxu0 0.0
      %452 = vmatpush1.msra.mxu0 0.0
      %453 = vmatprep.subr.mxu0 0.0
      %454 = vmatpush1.msra.mxu0 0.0
      %455 = vmatprep.subr.mxu0 0.0
      %456 = vmatpush1.msra.mxu0 0.0
      %457 = vmatprep.subr.mxu0 0.0
      %458 = vmatpush1.msra.mxu0 0.0
      %459 = vmatprep.subr.mxu0 0.0
      %460 = vmatpush1.msra.mxu0 0.0
      %461 = vmatprep.subr.mxu0 0.0
      %462 = vmatpush1.msra.mxu0 0.0
      %463 = vmatprep.subr.mxu0 0.0
      %464 = vmatpush1.msra.mxu0 0.0
      %465 = vmatprep.subr.mxu0 0.0
      %466 = vmatpush1.msra.mxu0 0.0
      %467 = vmatprep.subr.mxu0 0.0
      %468 = vmatpush1.msra.mxu0 0.0
      %469 = vmatprep.subr.mxu0 0.0
      %470 = vmatpush1.msra.mxu0 0.0
      %471 = vmatprep.subr.mxu0 0.0
      %472 = vmatpush1.msra.mxu0 0.0
      %473 = vmatprep.mubr.f32.mxu0 0.0
      %474 = vmatmul.mubr.f32.gmra.mrb[0].mxu0 %v407
      %v475 = vpop.f32.mrb[0].mxu0
      %v476 = vadd.f32 0.0, %v475
      %v477 = vpop.f32.mrb[0].mxu0
      %478 = vdwg.mxu0
      %480 = vrot.lane.b32.xlu0 %v476, 8
      %v481 = vpop.permute.xlu0 %480
      %vm483 = vcmask 130112
      %484 = vst.msk [vmem:[%s138] sm:$0xff] %vm483, %v481
      %v485 = vld [vmem:[%s134] sm:$0xff]
      %v486 = vmul.f32 %v485, 0.35355338
      %488 = vrot.lane.b32.xlu0 %v486, 112
      %v489 = vpop.permute.xlu0 %488
      %491 = vrot.lane.b32.xlu0 %v485, 80
      %v492 = vpop.permute.xlu0 %491
      %v493 = vsel %vm146, %v489, 0
      %v495 = vsel %vm146, %v492, 0
      %497 = vmatprep.subr.mxu0 0.0
      %498 = vmatpush1.xpose.msra.mxu0 %v495
      %499 = vmatprep.subr.mxu0 0.0
      %500 = vmatpush1.xpose.msra.mxu0 0.0
      %501 = vmatprep.subr.mxu0 0.0
      %502 = vmatpush1.xpose.msra.mxu0 0.0
      %503 = vmatprep.subr.mxu0 0.0
      %504 = vmatpush1.xpose.msra.mxu0 0.0
      %505 = vmatprep.subr.mxu0 0.0
      %506 = vmatpush1.xpose.msra.mxu0 0.0
      %507 = vmatprep.subr.mxu0 0.0
      %508 = vmatpush1.xpose.msra.mxu0 0.0
      %509 = vmatprep.subr.mxu0 0.0
      %510 = vmatpush1.xpose.msra.mxu0 0.0
      %511 = vmatprep.subr.mxu0 0.0
      %512 = vmatpush1.xpose.msra.mxu0 0.0
      %513 = vmatprep.subr.mxu0 0.0
      %514 = vmatpush1.xpose.msra.mxu0 0.0
      %515 = vmatprep.subr.mxu0 0.0
      %516 = vmatpush1.xpose.msra.mxu0 0.0
      %517 = vmatprep.subr.mxu0 0.0
      %518 = vmatpush1.xpose.msra.mxu0 0.0
      %519 = vmatprep.subr.mxu0 0.0
      %520 = vmatpush1.xpose.msra.mxu0 0.0
      %521 = vmatprep.subr.mxu0 0.0
      %522 = vmatpush1.xpose.msra.mxu0 0.0
      %523 = vmatprep.subr.mxu0 0.0
      %524 = vmatpush1.xpose.msra.mxu0 0.0
      %525 = vmatprep.subr.mxu0 0.0
      %526 = vmatpush1.xpose.msra.mxu0 0.0
      %527 = vmatprep.subr.mxu0 0.0
      %528 = vmatpush1.xpose.msra.mxu0 0.0
      %529 = vmatprep.subr.mxu0 0.0
      %530 = vmatpush1.xpose.msra.mxu0 0.0
      %531 = vmatprep.subr.mxu0 0.0
      %532 = vmatpush1.xpose.msra.mxu0 0.0
      %533 = vmatprep.subr.mxu0 0.0
      %534 = vmatpush1.xpose.msra.mxu0 0.0
      %535 = vmatprep.subr.mxu0 0.0
      %536 = vmatpush1.xpose.msra.mxu0 0.0
      %537 = vmatprep.subr.mxu0 0.0
      %538 = vmatpush1.xpose.msra.mxu0 0.0
      %539 = vmatprep.subr.mxu0 0.0
      %540 = vmatpush1.xpose.msra.mxu0 0.0
      %541 = vmatprep.subr.mxu0 0.0
      %542 = vmatpush1.xpose.msra.mxu0 0.0
      %543 = vmatprep.subr.mxu0 0.0
      %544 = vmatpush1.xpose.msra.mxu0 0.0
      %545 = vmatprep.subr.mxu0 0.0
      %546 = vmatpush1.xpose.msra.mxu0 0.0
      %547 = vmatprep.subr.mxu0 0.0
      %548 = vmatpush1.xpose.msra.mxu0 0.0
      %549 = vmatprep.subr.mxu0 0.0
      %550 = vmatpush1.xpose.msra.mxu0 0.0
      %551 = vmatprep.subr.mxu0 0.0
      %552 = vmatpush1.xpose.msra.mxu0 0.0
      %553 = vmatprep.subr.mxu0 0.0
      %554 = vmatpush1.xpose.msra.mxu0 0.0
      %555 = vmatprep.subr.mxu0 0.0
      %556 = vmatpush1.xpose.msra.mxu0 0.0
      %557 = vmatprep.subr.mxu0 0.0
      %558 = vmatpush1.xpose.msra.mxu0 0.0
      %559 = vmatprep.subr.mxu0 0.0
      %560 = vmatpush1.xpose.msra.mxu0 0.0
      %561 = vmatprep.mubr.f32.mxu0 0.0
      %562 = vmatmul.mubr.f32.gmra.mrb[0].mxu0 %v493
      %v563 = vpop.f32.mrb[0].mxu0
      %v564 = vadd.f32 %v140, %v563
      %v565 = vpop.f32.mrb[0].mxu0
      %566 = vdwg.mxu0
      %v567 = vsel %vm146, %v564, -inf
      %568 = vmax.xlane.f32.xlu0 %v567
      %v569 = vpop.xlane.xlu0 %568
      %v570 = vsub.f32 %v564, %v569
      %v571 = vmul.f32 %v570, 1.442695
      %v572 = vpow.pop %v571
      %v573 = vsel %vm146, %v572, 0.0
      %574 = vadd.xlane.f32.xlu0 %v573
      %v575 = vpop.xlane.xlu0 %574
      %v576 = vrcp.pop %v575
      %v577 = vmul.f32 %v572, %v576
      %578 = vrot.lane.b32.xlu0 %v485, 48
      %v579 = vpop.permute.xlu0 %578
      %v582 = vsel %vm146, %v577, 0
      %584 = vmatprep.subr.mxu0 0.0
      %585 = vmatpush1.msra.mxu0 %v579
      %586 = vmatprep.subr.mxu0 0.0
      %587 = vmatpush1.msra.mxu0 0.0
      %588 = vmatprep.subr.mxu0 0.0
      %589 = vmatpush1.msra.mxu0 0.0
      %590 = vmatprep.subr.mxu0 0.0
      %591 = vmatpush1.msra.mxu0 0.0
      %592 = vmatprep.subr.mxu0 0.0
      %593 = vmatpush1.msra.mxu0 0.0
      %594 = vmatprep.subr.mxu0 0.0
      %595 = vmatpush1.msra.mxu0 0.0
      %596 = vmatprep.subr.mxu0 0.0
      %597 = vmatpush1.msra.mxu0 0.0
      %598 = vmatprep.subr.mxu0 0.0
      %599 = vmatpush1.msra.mxu0 0.0
      %600 = vmatprep.subr.mxu0 0.0
      %601 = vmatpush1.msra.mxu0 0.0
      %602 = vmatprep.subr.mxu0 0.0
      %603 = vmatpush1.msra.mxu0 0.0
      %604 = vmatprep.subr.mxu0 0.0
      %605 = vmatpush1.msra.mxu0 0.0
      %606 = vmatprep.subr.mxu0 0.0
      %607 = vmatpush1.msra.mxu0 0.0
      %608 = vmatprep.subr.mxu0 0.0
      %609 = vmatpush1.msra.mxu0 0.0
      %610 = vmatprep.subr.mxu0 0.0
      %611 = vmatpush1.msra.mxu0 0.0
      %612 = vmatprep.subr.mxu0 0.0
      %613 = vmatpush1.msra.mxu0 0.0
      %614 = vmatprep.subr.mxu0 0.0
      %615 = vmatpush1.msra.mxu0 0.0
      %616 = vmatprep.subr.mxu0 0.0
      %617 = vmatpush1.msra.mxu0 0.0
      %618 = vmatprep.subr.mxu0 0.0
      %619 = vmatpush1.msra.mxu0 0.0
      %620 = vmatprep.subr.mxu0 0.0
      %621 = vmatpush1.msra.mxu0 0.0
      %622 = vmatprep.subr.mxu0 0.0
      %623 = vmatpush1.msra.mxu0 0.0
      %624 = vmatprep.subr.mxu0 0.0
      %625 = vmatpush1.msra.mxu0 0.0
      %626 = vmatprep.subr.mxu0 0.0
      %627 = vmatpush1.msra.mxu0 0.0
      %628 = vmatprep.subr.mxu0 0.0
      %629 = vmatpush1.msra.mxu0 0.0
      %630 = vmatprep.subr.mxu0 0.0
      %631 = vmatpush1.msra.mxu0 0.0
      %632 = vmatprep.subr.mxu0 0.0
      %633 = vmatpush1.msra.mxu0 0.0
      %634 = vmatprep.subr.mxu0 0.0
      %635 = vmatpush1.msra.mxu0 0.0
      %636 = vmatprep.subr.mxu0 0.0
      %637 = vmatpush1.msra.mxu0 0.0
      %638 = vmatprep.subr.mxu0 0.0
      %639 = vmatpush1.msra.mxu0 0.0
      %640 = vmatprep.subr.mxu0 0.0
      %641 = vmatpush1.msra.mxu0 0.0
      %642 = vmatprep.subr.mxu0 0.0
      %643 = vmatpush1.msra.mxu0 0.0
      %644 = vmatprep.subr.mxu0 0.0
      %645 = vmatpush1.msra.mxu0 0.0
      %646 = vmatprep.subr.mxu0 0.0
      %647 = vmatpush1.msra.mxu0 0.0
      %648 = vmatprep.mubr.f32.mxu0 0.0
      %649 = vmatmul.mubr.f32.gmra.mrb[0].mxu0 %v582
      %v650 = vpop.f32.mrb[0].mxu0
      %v651 = vadd.f32 0.0, %v650
      %v652 = vpop.f32.mrb[0].mxu0
      %653 = vdwg.mxu0
      %655 = vrot.lane.b32.xlu0 %v651, 16
      %v656 = vpop.permute.xlu0 %655
      %vm658 = vcmask 195712
      %659 = vst.msk [vmem:[%s138] sm:$0xff] %vm658, %v656
      %v660 = vld [vmem:[%s134] sm:$0xff]
      %v661 = vmul.f32 %v660, 0.35355338
      %663 = vrot.lane.b32.xlu0 %v661, 104
      %v664 = vpop.permute.xlu0 %663
      %666 = vrot.lane.b32.xlu0 %v660, 72
      %v667 = vpop.permute.xlu0 %666
      %v668 = vsel %vm146, %v664, 0
      %v670 = vsel %vm146, %v667, 0
      %672 = vmatprep.subr.mxu0 0.0
      %673 = vmatpush1.xpose.msra.mxu0 %v670
      %674 = vmatprep.subr.mxu0 0.0
      %675 = vmatpush1.xpose.msra.mxu0 0.0
      %676 = vmatprep.subr.mxu0 0.0
      %677 = vmatpush1.xpose.msra.mxu0 0.0
      %678 = vmatprep.subr.mxu0 0.0
      %679 = vmatpush1.xpose.msra.mxu0 0.0
      %680 = vmatprep.subr.mxu0 0.0
      %681 = vmatpush1.xpose.msra.mxu0 0.0
      %682 = vmatprep.subr.mxu0 0.0
      %683 = vmatpush1.xpose.msra.mxu0 0.0
      %684 = vmatprep.subr.mxu0 0.0
      %685 = vmatpush1.xpose.msra.mxu0 0.0
      %686 = vmatprep.subr.mxu0 0.0
      %687 = vmatpush1.xpose.msra.mxu0 0.0
      %688 = vmatprep.subr.mxu0 0.0
      %689 = vmatpush1.xpose.msra.mxu0 0.0
      %690 = vmatprep.subr.mxu0 0.0
      %691 = vmatpush1.xpose.msra.mxu0 0.0
      %692 = vmatprep.subr.mxu0 0.0
      %693 = vmatpush1.xpose.msra.mxu0 0.0
      %694 = vmatprep.subr.mxu0 0.0
      %695 = vmatpush1.xpose.msra.mxu0 0.0
      %696 = vmatprep.subr.mxu0 0.0
      %697 = vmatpush1.xpose.msra.mxu0 0.0
      %698 = vmatprep.subr.mxu0 0.0
      %699 = vmatpush1.xpose.msra.mxu0 0.0
      %700 = vmatprep.subr.mxu0 0.0
      %701 = vmatpush1.xpose.msra.mxu0 0.0
      %702 = vmatprep.subr.mxu0 0.0
      %703 = vmatpush1.xpose.msra.mxu0 0.0
      %704 = vmatprep.subr.mxu0 0.0
      %705 = vmatpush1.xpose.msra.mxu0 0.0
      %706 = vmatprep.subr.mxu0 0.0
      %707 = vmatpush1.xpose.msra.mxu0 0.0
      %708 = vmatprep.subr.mxu0 0.0
      %709 = vmatpush1.xpose.msra.mxu0 0.0
      %710 = vmatprep.subr.mxu0 0.0
      %711 = vmatpush1.xpose.msra.mxu0 0.0
      %712 = vmatprep.subr.mxu0 0.0
      %713 = vmatpush1.xpose.msra.mxu0 0.0
      %714 = vmatprep.subr.mxu0 0.0
      %715 = vmatpush1.xpose.msra.mxu0 0.0
      %716 = vmatprep.subr.mxu0 0.0
      %717 = vmatpush1.xpose.msra.mxu0 0.0
      %718 = vmatprep.subr.mxu0 0.0
      %719 = vmatpush1.xpose.msra.mxu0 0.0
      %720 = vmatprep.subr.mxu0 0.0
      %721 = vmatpush1.xpose.msra.mxu0 0.0
      %722 = vmatprep.subr.mxu0 0.0
      %723 = vmatpush1.xpose.msra.mxu0 0.0
      %724 = vmatprep.subr.mxu0 0.0
      %725 = vmatpush1.xpose.msra.mxu0 0.0
      %726 = vmatprep.subr.mxu0 0.0
      %727 = vmatpush1.xpose.msra.mxu0 0.0
      %728 = vmatprep.subr.mxu0 0.0
      %729 = vmatpush1.xpose.msra.mxu0 0.0
      %730 = vmatprep.subr.mxu0 0.0
      %731 = vmatpush1.xpose.msra.mxu0 0.0
      %732 = vmatprep.subr.mxu0 0.0
      %733 = vmatpush1.xpose.msra.mxu0 0.0
      %734 = vmatprep.subr.mxu0 0.0
      %735 = vmatpush1.xpose.msra.mxu0 0.0
      %736 = vmatprep.mubr.f32.mxu0 0.0
      %737 = vmatmul.mubr.f32.gmra.mrb[0].mxu0 %v668
      %v738 = vpop.f32.mrb[0].mxu0
      %v739 = vadd.f32 %v140, %v738
      %v740 = vpop.f32.mrb[0].mxu0
      %741 = vdwg.mxu0
      %v742 = vsel %vm146, %v739, -inf
      %743 = vmax.xlane.f32.xlu0 %v742
      %v744 = vpop.xlane.xlu0 %743
      %v745 = vsub.f32 %v739, %v744
      %v746 = vmul.f32 %v745, 1.442695
      %v747 = vpow.pop %v746
      %v748 = vsel %vm146, %v747, 0.0
      %749 = vadd.xlane.f32.xlu0 %v748
      %v750 = vpop.xlane.xlu0 %749
      %v751 = vrcp.pop %v750
      %v752 = vmul.f32 %v747, %v751
      %753 = vrot.lane.b32.xlu0 %v660, 40
      %v754 = vpop.permute.xlu0 %753
      %v757 = vsel %vm146, %v752, 0
      %759 = vmatprep.subr.mxu0 0.0
      %760 = vmatpush1.msra.mxu0 %v754
      %761 = vmatprep.subr.mxu0 0.0
      %762 = vmatpush1.msra.mxu0 0.0
      %763 = vmatprep.subr.mxu0 0.0
      %764 = vmatpush1.msra.mxu0 0.0
      %765 = vmatprep.subr.mxu0 0.0
      %766 = vmatpush1.msra.mxu0 0.0
      %767 = vmatprep.subr.mxu0 0.0
      %768 = vmatpush1.msra.mxu0 0.0
      %769 = vmatprep.subr.mxu0 0.0
      %770 = vmatpush1.msra.mxu0 0.0
      %771 = vmatprep.subr.mxu0 0.0
      %772 = vmatpush1.msra.mxu0 0.0
      %773 = vmatprep.subr.mxu0 0.0
      %774 = vmatpush1.msra.mxu0 0.0
      %775 = vmatprep.subr.mxu0 0.0
      %776 = vmatpush1.msra.mxu0 0.0
      %777 = vmatprep.subr.mxu0 0.0
      %778 = vmatpush1.msra.mxu0 0.0
      %779 = vmatprep.subr.mxu0 0.0
      %780 = vmatpush1.msra.mxu0 0.0
      %781 = vmatprep.subr.mxu0 0.0
      %782 = vmatpush1.msra.mxu0 0.0
      %783 = vmatprep.subr.mxu0 0.0
      %784 = vmatpush1.msra.mxu0 0.0
      %785 = vmatprep.subr.mxu0 0.0
      %786 = vmatpush1.msra.mxu0 0.0
      %787 = vmatprep.subr.mxu0 0.0
      %788 = vmatpush1.msra.mxu0 0.0
      %789 = vmatprep.subr.mxu0 0.0
      %790 = vmatpush1.msra.mxu0 0.0
      %791 = vmatprep.subr.mxu0 0.0
      %792 = vmatpush1.msra.mxu0 0.0
      %793 = vmatprep.subr.mxu0 0.0
      %794 = vmatpush1.msra.mxu0 0.0
      %795 = vmatprep.subr.mxu0 0.0
      %796 = vmatpush1.msra.mxu0 0.0
      %797 = vmatprep.subr.mxu0 0.0
      %798 = vmatpush1.msra.mxu0 0.0
      %799 = vmatprep.subr.mxu0 0.0
      %800 = vmatpush1.msra.mxu0 0.0
      %801 = vmatprep.subr.mxu0 0.0
      %802 = vmatpush1.msra.mxu0 0.0
      %803 = vmatprep.subr.mxu0 0.0
      %804 = vmatpush1.msra.mxu0 0.0
      %805 = vmatprep.subr.mxu0 0.0
      %806 = vmatpush1.msra.mxu0 0.0
      %807 = vmatprep.subr.mxu0 0.0
      %808 = vmatpush1.msra.mxu0 0.0
      %809 = vmatprep.subr.mxu0 0.0
      %810 = vmatpush1.msra.mxu0 0.0
      %811 = vmatprep.subr.mxu0 0.0
      %812 = vmatpush1.msra.mxu0 0.0
      %813 = vmatprep.subr.mxu0 0.0
      %814 = vmatpush1.msra.mxu0 0.0
      %815 = vmatprep.subr.mxu0 0.0
      %816 = vmatpush1.msra.mxu0 0.0
      %817 = vmatprep.subr.mxu0 0.0
      %818 = vmatpush1.msra.mxu0 0.0
      %819 = vmatprep.subr.mxu0 0.0
      %820 = vmatpush1.msra.mxu0 0.0
      %821 = vmatprep.subr.mxu0 0.0
      %822 = vmatpush1.msra.mxu0 0.0
      %823 = vmatprep.mubr.f32.mxu0 0.0
      %824 = vmatmul.mubr.f32.gmra.mrb[0].mxu0 %v757
      %v825 = vpop.f32.mrb[0].mxu0
      %v826 = vadd.f32 0.0, %v825
      %v827 = vpop.f32.mrb[0].mxu0
      %828 = vdwg.mxu0
      %830 = vrot.lane.b32.xlu0 %v826, 24
      %v831 = vpop.permute.xlu0 %830
      %vm833 = vcmask 261312
      %834 = vst.msk [vmem:[%s138] sm:$0xff] %vm833, %v831
      %p835 = scmp.lt.s32.totalorder %s13, 1
      %s836 = scalar_select %p835, %s13, 1
      %s837 = smul.addr %s836, 8
      %s838 = scalar_lea.vmem %s2, %s837
      // Predicated region
      $region29: #{_mha_forward_self.4} parent=27 // pred_check
        %p839 = pneg %p78
      $region30: #{_mha_forward_self.4} parent=27 // pred_check_branch
        %841 = sbr.rel (%p839) target = $region32
      $region31: #{_mha_forward_self.4} parent=27 // pred_region
        _
      $region32: #{_mha_forward_self.4} parent=27 // pred_fallthru
        _
    $region28: #{_mha_forward_self.4} parent=5 // pred_fallthru
      _
    %p842 = scmp.le.s32.totalorder 2, %s8
    // Predicated region
    $region33: #{_mha_forward_self.4} parent=5 // pred_check
      %p843 = pneg %p842
    $region34: #{_mha_forward_self.4} parent=5 // pred_check_branch
      %845 = sbr.rel (%p843) target = $region36
    $region35: #{_mha_forward_self.4} parent=5 // pred_region
      %s846 = ssub.s32 %s8, 2
      // Predicated region
      $region37: #{_mha_forward_self.4} parent=35 // pred_check
        %p847 = pneg %p84
      $region38: #{_mha_forward_self.4} parent=35 // pred_check_branch
        %849 = sbr.rel (%p847) target = $region40
      $region39: #{_mha_forward_self.4} parent=35 // pred_region
        %p850 = scmp.lt.s32.totalorder %s14, 1
        %s851 = scalar_select %p850, %s14, 1
        %s852 = smul.addr %s851, 8
        %s853 = scalar_lea.vmem %s2, %s852
      $region40: #{_mha_forward_self.4} parent=35 // pred_fallthru
        _
    $region36: #{_mha_forward_self.4} parent=5 // pred_fallthru
      _
  $region6: #{_mha_forward_self.4} parent=0 // loop_footer
    %s12 = sadd.s32 1, %s8
  $region7: #{_mha_forward_self.4} parent=0 // loop_footer_branch
    %7 = sbr.rel target = $region3
  $region8: #{_mha_forward_self.4} parent=0 // loop_exit
    _

</llo_original>
